<compile_context>
chip_gen: v7x
topology: tpu7x:2x2x1
jax: 0.10.0
libtpu: 0.0.40
codegen_flags: <defaults>
</compile_context>

<pallas_src>
import functools

import jax
import jax.numpy as jnp
from jax import lax
from jax.experimental import pallas as pl
from jax.experimental.pallas import tpu as pltpu

BN_EPS = 1e-5


def _sepconv_kernel(x_ref, dw1_ref, pw1_ref, red1_ref, brd1_ref, g1_ref, b1_ref,
                    dw2_ref, pw2_ref, red2_ref, brd2_ref, g2_ref, b2_ref,
                    out_ref, pad_ref, *, k, stride, pad):
    """Whole SepConv forward, fused, with W folded into the 128-lane axis."""
    f32 = jnp.float32
    N, Hp, _ = x_ref.shape
    Cin = g1_ref.shape[1]
    Cout = g2_ref.shape[1]
    Wd1 = dw1_ref.shape[1] // Cin          # dense (stride-1) width after depthwise-1
    Lp1 = pw1_ref.shape[1]                 # (W1 + 2*pad) * Cin: W-halo is zero columns
    W1 = Lp1 // Cin - 2 * pad
    W2 = dw2_ref.shape[1] // Cin
    H1 = (Hp - k) // stride + 1
    H2 = H1 + 2 * pad - k + 1

    dw1 = dw1_ref[...]
    dw2 = dw2_ref[...]

    def depthwise(xp, taps, ho, wo, s):
        # xp: (n, rows, lanes) with W folded into lanes; taps: (k*k, wo*Cin).
        # One cross-lane shift per kw (hoisted); the inner kh loop only slices rows.
        n = xp.shape[0]
        acc = jnp.zeros((n, ho, wo * Cin), f32)
        for kw in range(k):
            xw = xp[:, :, kw * Cin:(kw + wo) * Cin]
            for kh in range(k):
                if s == 1:
                    win = xw[:, kh:kh + ho, :]
                else:
                    win = lax.slice(xw, (0, kh, 0),
                                    (n, kh + (ho - 1) * s + 1, wo * Cin),
                                    (1, s, 1))
                idx = kh * k + kw
                acc = acc + win * taps[idx:idx + 1, :].reshape(1, 1, wo * Cin)
        return acc

    # ---- stage 1: ReLU -> depthwise(k, stride) -> 1x1 (stride-W decimation and
    #      W-halo zero columns are folded into pw1 in the wrapper) ----------------
    xr = jnp.maximum(x_ref[...], 0.0)                     # zero pad rows/lanes stay 0
    a = depthwise(xr, dw1, H1, Wd1, stride)               # (N, H1, Wd1*Cin)
    y = jnp.dot(a.reshape(N * H1, Wd1 * Cin), pw1_ref[...],
                preferred_element_type=f32)               # single MXU call, M = N*H1

    # ---- BN1: single-pass batch statistics (sum / sum-of-squares) ---------------
    s1 = jnp.sum(y, axis=0, keepdims=True)                # (1, Lp1)
    q1 = jnp.sum(y * y, axis=0, keepdims=True)
    cnt1 = float(N * H1 * W1)
    ch_sum1 = jnp.dot(s1, red1_ref[...], preferred_element_type=f32)   # (1, Cin)
    ch_sq1 = jnp.dot(q1, red1_ref[...], preferred_element_type=f32)
    mean1 = ch_sum1 / cnt1
    var1 = jnp.maximum(ch_sq1 / cnt1 - mean1 * mean1, 0.0)
    sc1 = g1_ref[...] * lax.rsqrt(var1 + BN_EPS)
    sh1 = b1_ref[...] - mean1 * sc1
    sc1f = jnp.dot(sc1, brd1_ref[...], preferred_element_type=f32)     # 0 in W-halo lanes
    sh1f = jnp.dot(sh1, brd1_ref[...], preferred_element_type=f32)

    # ---- stage 2 input: BN1 -> ReLU; H-halo via sublane copy into zeroed scratch -
    a1 = jnp.maximum(y * sc1f + sh1f, 0.0)                # W-halo lanes stay exactly 0
    if pad > 0:
        zrow = jnp.zeros((N, pad, Lp1), f32)
        pad_ref[:, 0:pad, :] = zrow
        pad_ref[:, pad + H1:2 * pad + H1, :] = zrow
    pad_ref[:, pad:pad + H1, :] = a1.reshape(N, H1, Lp1)

    # ---- stage 2: depthwise(k, 1) -> 1x1 -----------------------------------------
    b = depthwise(pad_ref[...], dw2, H2, W2, 1)           # (N, H2, W2*Cin)
    z = jnp.dot(b.reshape(N * H2, W2 * Cin), pw2_ref[...],
                preferred_element_type=f32)               # (N*H2, W2*Cout)

    # ---- BN2: park z in out_ref (bounds its live range), then rescale in place ---
    s2 = jnp.sum(z, axis=0, keepdims=True)
    q2 = jnp.sum(z * z, axis=0, keepdims=True)
    out_ref[...] = z
    cnt2 = float(N * H2 * W2)
    ch_sum2 = jnp.dot(s2, red2_ref[...], preferred_element_type=f32)   # (1, Cout)
    ch_sq2 = jnp.dot(q2, red2_ref[...], preferred_element_type=f32)
    mean2 = ch_sum2 / cnt2
    var2 = jnp.maximum(ch_sq2 / cnt2 - mean2 * mean2, 0.0)
    sc2 = g2_ref[...] * lax.rsqrt(var2 + BN_EPS)
    sh2 = b2_ref[...] - mean2 * sc2
    sc2f = jnp.dot(sc2, brd2_ref[...], preferred_element_type=f32)
    sh2f = jnp.dot(sh2, brd2_ref[...], preferred_element_type=f32)
    out_ref[...] = out_ref[...] * sc2f + sh2f             # lane-dense (N*H2, W2*Cout)

    # TODO(synk): BatchNorm running_mean/running_var buffer updates (training-mode
    # side effect) are not modeled; only the forward output is reproduced.
    # TODO(synk): for production shapes, add a grid over (N, H row blocks) with
    # dimension_semantics=("parallel", ...) plus a BN stats/apply split (or
    # cross-tile sum/sum-sq accumulators) so both v7x TensorCores and HBM<->VMEM
    # pipelining are used; the test shapes fit one VMEM-resident invocation.


def prepare_sepconv(params, *, H, W, kernel_size, stride, padding):
    """Build the constant kernel operands ONCE per parameter set (do not rebuild
    the kron/pad/tile structure matrices on every forward call)."""
    k, s, p = kernel_size, stride, padding
    wdw1, wpw1, g1, b1, wdw2, wpw2, g2, b2 = params
    Cin = wdw1.shape[0]
    Cout = wpw2.shape[0]
    f32 = jnp.float32

    Wp = W + 2 * p
    W1 = (Wp - k) // s + 1
    Wd1 = Wp - k + 1                        # dense (stride-1) depthwise-1 width
    W2 = W1 + 2 * p - k + 1

    # Depthwise taps, tiled across the W blocks of the folded lane axis: (k*k, W*C).
    dw1 = jnp.tile(jnp.transpose(wdw1[:, 0], (1, 2, 0)).reshape(k * k, Cin).astype(f32),
                   (1, Wd1))
    dw2 = jnp.tile(jnp.transpose(wdw2[:, 0], (1, 2, 0)).reshape(k * k, Cin).astype(f32),
                   (1, W2))

    # 1x1 convs as block-diagonal (kron) matmuls over the folded lane axis.
    wp1 = jnp.transpose(wpw1[:, :, 0, 0], (1, 0)).astype(f32)            # (Cin, Cin)
    wp2 = jnp.transpose(wpw2[:, :, 0, 0], (1, 0)).astype(f32)            # (Cin, Cout)
    pw1 = jnp.kron(jnp.eye(W1, dtype=f32), wp1)                          # (W1*Cin, W1*Cin)
    if s > 1:
        # Fold the stride-W decimation (dense Wd1 -> strided W1) into pw1.
        sel = (jnp.arange(Wd1)[:, None] == s * jnp.arange(W1)[None, :]).astype(f32)
        dec = jnp.kron(sel, jnp.eye(Cin, dtype=f32))                     # (Wd1*Cin, W1*Cin)
        pw1 = jnp.dot(dec, pw1)
    pw1 = jnp.pad(pw1, ((0, 0), (p * Cin, p * Cin)))                     # W-halo zero columns
    pw2 = jnp.kron(jnp.eye(W2, dtype=f32), wp2)                          # (W2*Cin, W2*Cout)

    # BN reduce (folded lanes -> channel) and broadcast (channel -> folded lanes).
    red1 = jnp.pad(jnp.kron(jnp.ones((W1, 1), f32), jnp.eye(Cin, dtype=f32)),
                   ((p * Cin, p * Cin), (0, 0)))                         # ((W1+2p)*Cin, Cin)
    brd1 = jnp.transpose(red1, (1, 0))
    red2 = jnp.kron(jnp.ones((W2, 1), f32), jnp.eye(Cout, dtype=f32))    # (W2*Cout, Cout)
    brd2 = jnp.transpose(red2, (1, 0))

    return (dw1, pw1, red1, brd1,
            g1.reshape(1, Cin).astype(f32), b1.reshape(1, Cin).astype(f32),
            dw2, pw2, red2, brd2,
            g2.reshape(1, Cout).astype(f32), b2.reshape(1, Cout).astype(f32))


@functools.partial(jax.jit, static_argnames=("kernel_size", "stride", "padding"))
def sep_conv(x_nchw, ops, *, kernel_size, stride, padding):
    """NCHW in / NCHW out. `ops` comes from prepare_sepconv()."""
    k, s, p = kernel_size, stride, padding
    dw1, pw1, red1, brd1, g1, b1, dw2, pw2, red2, brd2, g2, b2 = ops
    N, Cin, H, W = x_nchw.shape
    Cout = g2.shape[1]
    f32 = jnp.float32

    Hp, Wp = H + 2 * p, W + 2 * p
    H1 = (Hp - k) // s + 1
    H2 = H1 + 2 * p - k + 1
    W2 = dw2.shape[1] // Cin
    Lp1 = pw1.shape[1]

    # Input: NCHW -> NHWC -> zero-pad H/W -> fold W into the lane axis.
    # (ReLU(0)=0, so padding before the in-kernel ReLU is equivalent.)
    x = jnp.transpose(x_nchw, (0, 2, 3, 1)).astype(f32)
    x = jnp.pad(x, ((0, 0), (p, p), (p, p), (0, 0)))
    x = x.reshape(N, Hp, Wp * Cin)

    kern = functools.partial(_sepconv_kernel, k=k, stride=s, pad=p)
    operands = (x, dw1, pw1, red1, brd1, g1, b1, dw2, pw2, red2, brd2, g2, b2)
    out = pl.pallas_call(
        kern,
        out_shape=jax.ShapeDtypeStruct((N * H2, W2 * Cout), f32),
        in_specs=[pl.BlockSpec(memory_space=pltpu.MemorySpace.VMEM)] * len(operands),
        out_specs=pl.BlockSpec(memory_space=pltpu.MemorySpace.VMEM),
        scratch_shapes=[pltpu.VMEM((N, H1 + 2 * p, Lp1), f32)],
        compiler_params=pltpu.CompilerParams(vmem_limit_bytes=32 * 1024 * 1024),
    )(*operands)

    out = out.reshape(N, H2, W2, Cout)
    return jnp.transpose(out, (0, 3, 1, 2))                              # back to NCHW


# ------------------------- pure-JAX reference (NCHW) -------------------------
def _reference(x, params, *, kernel_size, stride, padding):
    k, s, p = kernel_size, stride, padding
    wdw1, wpw1, g1, b1, wdw2, wpw2, g2, b2 = params

    def dwconv(x, w, st):
        return lax.conv_general_dilated(
            x, w, window_strides=(st, st), padding=[(p, p), (p, p)],
            dimension_numbers=("NCHW", "OIHW", "NCHW"),
            feature_group_count=x.shape[1])

    def pwconv(x, w):
        return lax.conv_general_dilated(
            x, w, window_strides=(1, 1), padding="VALID",
            dimension_numbers=("NCHW", "OIHW", "NCHW"))

    def bn(x, g, b):
        mean = jnp.mean(x, axis=(0, 2, 3), keepdims=True)
        var = jnp.mean((x - mean) ** 2, axis=(0, 2, 3), keepdims=True)
        xn = (x - mean) * lax.rsqrt(var + BN_EPS)
        return xn * g.reshape(1, -1, 1, 1) + b.reshape(1, -1, 1, 1)

    y = jnp.maximum(x, 0.0)
    y = bn(pwconv(dwconv(y, wdw1, s), wpw1), g1, b1)
    y = jnp.maximum(y, 0.0)
    y = bn(pwconv(dwconv(y, wdw2, 1), wpw2), g2, b2)
    return y


if __name__ == "__main__":
    key = jax.random.PRNGKey(0)
    N, Cin, Cout, H, W = 2, 8, 16, 16, 16
    k, s, p = 3, 1, 1

    keys = jax.random.split(key, 9)
    x = jax.random.normal(keys[0], (N, Cin, H, W), jnp.float32)
    wdw1 = 0.2 * jax.random.normal(keys[1], (Cin, 1, k, k), jnp.float32)
    wpw1 = 0.2 * jax.random.normal(keys[2], (Cin, Cin, 1, 1), jnp.float32)
    g1 = 1.0 + 0.1 * jax.random.normal(keys[3], (Cin,), jnp.float32)
    b1 = 0.1 * jax.random.normal(keys[4], (Cin,), jnp.float32)
    wdw2 = 0.2 * jax.random.normal(keys[5], (Cin, 1, k, k), jnp.float32)
    wpw2 = 0.2 * jax.random.normal(keys[6], (Cout, Cin, 1, 1), jnp.float32)
    g2 = 1.0 + 0.1 * jax.random.normal(keys[7], (Cout,), jnp.float32)
    b2 = 0.1 * jax.random.normal(keys[8], (Cout,), jnp.float32)
    params = (wdw1, wpw1, g1, b1, wdw2, wpw2, g2, b2)

    # Structure matrices built once per parameter set, reused across forwards.
    ops = prepare_sepconv(params, H=H, W=W, kernel_size=k, stride=s, padding=p)

    out = sep_conv(x, ops, kernel_size=k, stride=s, padding=p)
    out = jax.block_until_ready(out)

    ref = _reference(x, params, kernel_size=k, stride=s, padding=p)
    assert out.shape == ref.shape, (out.shape, ref.shape)
    max_err = float(jnp.max(jnp.abs(out - ref)))
    assert jnp.allclose(out, ref, atol=1e-4, rtol=1e-4), max_err
    print("KERNEL_OK")
</pallas_src>

<mosaic_0001>
module attributes {stable_mosaic.version = 11 : i64} {
  func.func @_sepconv_kernel(%arg0: memref<2x18x144xf32, #tpu.memory_space<vmem>>, %arg1: memref<9x128xf32, #tpu.memory_space<vmem>>, %arg2: memref<128x144xf32, #tpu.memory_space<vmem>>, %arg3: memref<144x8xf32, #tpu.memory_space<vmem>>, %arg4: memref<8x144xf32, #tpu.memory_space<vmem>>, %arg5: memref<1x8xf32, #tpu.memory_space<vmem>>, %arg6: memref<1x8xf32, #tpu.memory_space<vmem>>, %arg7: memref<9x128xf32, #tpu.memory_space<vmem>>, %arg8: memref<128x256xf32, #tpu.memory_space<vmem>>, %arg9: memref<256x16xf32, #tpu.memory_space<vmem>>, %arg10: memref<16x256xf32, #tpu.memory_space<vmem>>, %arg11: memref<1x16xf32, #tpu.memory_space<vmem>>, %arg12: memref<1x16xf32, #tpu.memory_space<vmem>>, %arg13: memref<32x256xf32, #tpu.memory_space<vmem>>, %arg14: memref<2x18x144xf32, #tpu.memory_space<vmem>>) attributes {dimension_semantics = [], scalar_prefetch = 0 : i64, scratch_operands = 1 : i64, tpu.core_type = #tpu.core_type<tc>} {
    %c0 = arith.constant 0 : index
    %c0_0 = arith.constant 0 : index
    %0 = vector.load %arg1[%c0, %c0_0] : memref<9x128xf32, #tpu.memory_space<vmem>>, vector<9x128xf32>
    %c0_1 = arith.constant 0 : index
    %c0_2 = arith.constant 0 : index
    %1 = vector.load %arg7[%c0_1, %c0_2] : memref<9x128xf32, #tpu.memory_space<vmem>>, vector<9x128xf32>
    %c0_3 = arith.constant 0 : index
    %c0_4 = arith.constant 0 : index
    %c0_5 = arith.constant 0 : index
    %2 = vector.load %arg0[%c0_3, %c0_4, %c0_5] : memref<2x18x144xf32, #tpu.memory_space<vmem>>, vector<2x18x144xf32>
    %cst = arith.constant 0.000000e+00 : f32
    %3 = vector.broadcast %cst : f32 to vector<2x18x144xf32>
    %4 = arith.maximumf %2, %3 : vector<2x18x144xf32>
    %cst_6 = arith.constant 0.000000e+00 : f32
    %5 = vector.broadcast %cst_6 : f32 to vector<2x16x128xf32>
    %6 = vector.extract_strided_slice %4 {offsets = [0, 0, 0], sizes = [2, 18, 128], strides = [1, 1, 1]} : vector<2x18x144xf32> to vector<2x18x128xf32>
    %7 = vector.extract_strided_slice %6 {offsets = [0, 0, 0], sizes = [2, 16, 128], strides = [1, 1, 1]} : vector<2x18x128xf32> to vector<2x16x128xf32>
    %8 = vector.extract_strided_slice %0 {offsets = [0, 0], sizes = [1, 128], strides = [1, 1]} : vector<9x128xf32> to vector<1x128xf32>
    %9 = vector.shape_cast %8 : vector<1x128xf32> to vector<1x1x128xf32>
    %10 = vector.broadcast %9 : vector<1x1x128xf32> to vector<2x16x128xf32>
    %11 = arith.mulf %7, %10 : vector<2x16x128xf32>
    %12 = arith.addf %5, %11 : vector<2x16x128xf32>
    %13 = vector.extract_strided_slice %6 {offsets = [0, 1, 0], sizes = [2, 16, 128], strides = [1, 1, 1]} : vector<2x18x128xf32> to vector<2x16x128xf32>
    %14 = vector.extract_strided_slice %0 {offsets = [3, 0], sizes = [1, 128], strides = [1, 1]} : vector<9x128xf32> to vector<1x128xf32>
    %15 = vector.shape_cast %14 : vector<1x128xf32> to vector<1x1x128xf32>
    %16 = vector.broadcast %15 : vector<1x1x128xf32> to vector<2x16x128xf32>
    %17 = arith.mulf %13, %16 : vector<2x16x128xf32>
    %18 = arith.addf %12, %17 : vector<2x16x128xf32>
    %19 = vector.extract_strided_slice %6 {offsets = [0, 2, 0], sizes = [2, 16, 128], strides = [1, 1, 1]} : vector<2x18x128xf32> to vector<2x16x128xf32>
    %20 = vector.extract_strided_slice %0 {offsets = [6, 0], sizes = [1, 128], strides = [1, 1]} : vector<9x128xf32> to vector<1x128xf32>
    %21 = vector.shape_cast %20 : vector<1x128xf32> to vector<1x1x128xf32>
    %22 = vector.broadcast %21 : vector<1x1x128xf32> to vector<2x16x128xf32>
    %23 = arith.mulf %19, %22 : vector<2x16x128xf32>
    %24 = arith.addf %18, %23 : vector<2x16x128xf32>
    %25 = vector.extract_strided_slice %4 {offsets = [0, 0, 8], sizes = [2, 18, 128], strides = [1, 1, 1]} : vector<2x18x144xf32> to vector<2x18x128xf32>
    %26 = vector.extract_strided_slice %25 {offsets = [0, 0, 0], sizes = [2, 16, 128], strides = [1, 1, 1]} : vector<2x18x128xf32> to vector<2x16x128xf32>
    %27 = vector.extract_strided_slice %0 {offsets = [1, 0], sizes = [1, 128], strides = [1, 1]} : vector<9x128xf32> to vector<1x128xf32>
    %28 = vector.shape_cast %27 : vector<1x128xf32> to vector<1x1x128xf32>
    %29 = vector.broadcast %28 : vector<1x1x128xf32> to vector<2x16x128xf32>
    %30 = arith.mulf %26, %29 : vector<2x16x128xf32>
    %31 = arith.addf %24, %30 : vector<2x16x128xf32>
    %32 = vector.extract_strided_slice %25 {offsets = [0, 1, 0], sizes = [2, 16, 128], strides = [1, 1, 1]} : vector<2x18x128xf32> to vector<2x16x128xf32>
    %33 = vector.extract_strided_slice %0 {offsets = [4, 0], sizes = [1, 128], strides = [1, 1]} : vector<9x128xf32> to vector<1x128xf32>
    %34 = vector.shape_cast %33 : vector<1x128xf32> to vector<1x1x128xf32>
    %35 = vector.broadcast %34 : vector<1x1x128xf32> to vector<2x16x128xf32>
    %36 = arith.mulf %32, %35 : vector<2x16x128xf32>
    %37 = arith.addf %31, %36 : vector<2x16x128xf32>
    %38 = vector.extract_strided_slice %25 {offsets = [0, 2, 0], sizes = [2, 16, 128], strides = [1, 1, 1]} : vector<2x18x128xf32> to vector<2x16x128xf32>
    %39 = vector.extract_strided_slice %0 {offsets = [7, 0], sizes = [1, 128], strides = [1, 1]} : vector<9x128xf32> to vector<1x128xf32>
    %40 = vector.shape_cast %39 : vector<1x128xf32> to vector<1x1x128xf32>
    %41 = vector.broadcast %40 : vector<1x1x128xf32> to vector<2x16x128xf32>
    %42 = arith.mulf %38, %41 : vector<2x16x128xf32>
    %43 = arith.addf %37, %42 : vector<2x16x128xf32>
    %44 = vector.extract_strided_slice %4 {offsets = [0, 0, 16], sizes = [2, 18, 128], strides = [1, 1, 1]} : vector<2x18x144xf32> to vector<2x18x128xf32>
    %45 = vector.extract_strided_slice %44 {offsets = [0, 0, 0], sizes = [2, 16, 128], strides = [1, 1, 1]} : vector<2x18x128xf32> to vector<2x16x128xf32>
    %46 = vector.extract_strided_slice %0 {offsets = [2, 0], sizes = [1, 128], strides = [1, 1]} : vector<9x128xf32> to vector<1x128xf32>
    %47 = vector.shape_cast %46 : vector<1x128xf32> to vector<1x1x128xf32>
    %48 = vector.broadcast %47 : vector<1x1x128xf32> to vector<2x16x128xf32>
    %49 = arith.mulf %45, %48 : vector<2x16x128xf32>
    %50 = arith.addf %43, %49 : vector<2x16x128xf32>
    %51 = vector.extract_strided_slice %44 {offsets = [0, 1, 0], sizes = [2, 16, 128], strides = [1, 1, 1]} : vector<2x18x128xf32> to vector<2x16x128xf32>
    %52 = vector.extract_strided_slice %0 {offsets = [5, 0], sizes = [1, 128], strides = [1, 1]} : vector<9x128xf32> to vector<1x128xf32>
    %53 = vector.shape_cast %52 : vector<1x128xf32> to vector<1x1x128xf32>
    %54 = vector.broadcast %53 : vector<1x1x128xf32> to vector<2x16x128xf32>
    %55 = arith.mulf %51, %54 : vector<2x16x128xf32>
    %56 = arith.addf %50, %55 : vector<2x16x128xf32>
    %57 = vector.extract_strided_slice %44 {offsets = [0, 2, 0], sizes = [2, 16, 128], strides = [1, 1, 1]} : vector<2x18x128xf32> to vector<2x16x128xf32>
    %58 = vector.extract_strided_slice %0 {offsets = [8, 0], sizes = [1, 128], strides = [1, 1]} : vector<9x128xf32> to vector<1x128xf32>
    %59 = vector.shape_cast %58 : vector<1x128xf32> to vector<1x1x128xf32>
    %60 = vector.broadcast %59 : vector<1x1x128xf32> to vector<2x16x128xf32>
    %61 = arith.mulf %57, %60 : vector<2x16x128xf32>
    %62 = arith.addf %56, %61 : vector<2x16x128xf32>
    %63 = vector.shape_cast %62 : vector<2x16x128xf32> to vector<32x128xf32>
    %c0_7 = arith.constant 0 : index
    %c0_8 = arith.constant 0 : index
    %64 = vector.load %arg2[%c0_7, %c0_8] : memref<128x144xf32, #tpu.memory_space<vmem>>, vector<128x144xf32>
    %cst_9 = arith.constant dense<0.000000e+00> : vector<32x144xf32>
    %65 = tpu.matmul %63, %64, %cst_9 {dimension_numbers = #tpu.dot_dimension_numbers<[1], [0], [0], [1], [0, 0, 1, 1], [], []>} : vector<32x128xf32>, vector<128x144xf32>, vector<32x144xf32> -> vector<32x144xf32>
    %cst_10 = arith.constant dense<0.000000e+00> : vector<144xf32>
    %66 = vector.multi_reduction <add>, %65, %cst_10 [0] : vector<32x144xf32> to vector<144xf32>
    %67 = vector.shape_cast %66 : vector<144xf32> to vector<1x144xf32>
    %68 = arith.mulf %65, %65 : vector<32x144xf32>
    %cst_11 = arith.constant dense<0.000000e+00> : vector<144xf32>
    %69 = vector.multi_reduction <add>, %68, %cst_11 [0] : vector<32x144xf32> to vector<144xf32>
    %70 = vector.shape_cast %69 : vector<144xf32> to vector<1x144xf32>
    %c0_12 = arith.constant 0 : index
    %c0_13 = arith.constant 0 : index
    %71 = vector.load %arg3[%c0_12, %c0_13] : memref<144x8xf32, #tpu.memory_space<vmem>>, vector<144x8xf32>
    %cst_14 = arith.constant dense<0.000000e+00> : vector<1x8xf32>
    %72 = tpu.matmul %67, %71, %cst_14 {dimension_numbers = #tpu.dot_dimension_numbers<[1], [0], [0], [1], [0, 0, 1, 1], [], []>} : vector<1x144xf32>, vector<144x8xf32>, vector<1x8xf32> -> vector<1x8xf32>
    %c0_15 = arith.constant 0 : index
    %c0_16 = arith.constant 0 : index
    %73 = vector.load %arg3[%c0_15, %c0_16] : memref<144x8xf32, #tpu.memory_space<vmem>>, vector<144x8xf32>
    %cst_17 = arith.constant dense<0.000000e+00> : vector<1x8xf32>
    %74 = tpu.matmul %70, %73, %cst_17 {dimension_numbers = #tpu.dot_dimension_numbers<[1], [0], [0], [1], [0, 0, 1, 1], [], []>} : vector<1x144xf32>, vector<144x8xf32>, vector<1x8xf32> -> vector<1x8xf32>
    %cst_18 = arith.constant 5.120000e+02 : f32
    %75 = vector.broadcast %cst_18 : f32 to vector<1x8xf32>
    %76 = arith.divf %72, %75 : vector<1x8xf32>
    %cst_19 = arith.constant 5.120000e+02 : f32
    %77 = vector.broadcast %cst_19 : f32 to vector<1x8xf32>
    %78 = arith.divf %74, %77 : vector<1x8xf32>
    %79 = arith.mulf %76, %76 : vector<1x8xf32>
    %80 = arith.subf %78, %79 : vector<1x8xf32>
    %cst_20 = arith.constant 0.000000e+00 : f32
    %81 = vector.broadcast %cst_20 : f32 to vector<1x8xf32>
    %82 = arith.maximumf %80, %81 : vector<1x8xf32>
    %c0_21 = arith.constant 0 : index
    %c0_22 = arith.constant 0 : index
    %83 = vector.load %arg5[%c0_21, %c0_22] : memref<1x8xf32, #tpu.memory_space<vmem>>, vector<1x8xf32>
    %cst_23 = arith.constant 9.99999974E-6 : f32
    %84 = vector.broadcast %cst_23 : f32 to vector<1x8xf32>
    %85 = arith.addf %82, %84 : vector<1x8xf32>
    %86 = math.rsqrt %85 : vector<1x8xf32>
    %87 = arith.mulf %83, %86 : vector<1x8xf32>
    %c0_24 = arith.constant 0 : index
    %c0_25 = arith.constant 0 : index
    %88 = vector.load %arg6[%c0_24, %c0_25] : memref<1x8xf32, #tpu.memory_space<vmem>>, vector<1x8xf32>
    %89 = arith.mulf %76, %87 : vector<1x8xf32>
    %90 = arith.subf %88, %89 : vector<1x8xf32>
    %c0_26 = arith.constant 0 : index
    %c0_27 = arith.constant 0 : index
    %91 = vector.load %arg4[%c0_26, %c0_27] : memref<8x144xf32, #tpu.memory_space<vmem>>, vector<8x144xf32>
    %cst_28 = arith.constant dense<0.000000e+00> : vector<1x144xf32>
    %92 = tpu.matmul %87, %91, %cst_28 {dimension_numbers = #tpu.dot_dimension_numbers<[1], [0], [0], [1], [0, 0, 1, 1], [], []>} : vector<1x8xf32>, vector<8x144xf32>, vector<1x144xf32> -> vector<1x144xf32>
    %c0_29 = arith.constant 0 : index
    %c0_30 = arith.constant 0 : index
    %93 = vector.load %arg4[%c0_29, %c0_30] : memref<8x144xf32, #tpu.memory_space<vmem>>, vector<8x144xf32>
    %cst_31 = arith.constant dense<0.000000e+00> : vector<1x144xf32>
    %94 = tpu.matmul %90, %93, %cst_31 {dimension_numbers = #tpu.dot_dimension_numbers<[1], [0], [0], [1], [0, 0, 1, 1], [], []>} : vector<1x8xf32>, vector<8x144xf32>, vector<1x144xf32> -> vector<1x144xf32>
    %95 = vector.broadcast %92 : vector<1x144xf32> to vector<32x144xf32>
    %96 = arith.mulf %65, %95 : vector<32x144xf32>
    %97 = vector.broadcast %94 : vector<1x144xf32> to vector<32x144xf32>
    %98 = arith.addf %96, %97 : vector<32x144xf32>
    %cst_32 = arith.constant 0.000000e+00 : f32
    %99 = vector.broadcast %cst_32 : f32 to vector<32x144xf32>
    %100 = arith.maximumf %98, %99 : vector<32x144xf32>
    %cst_33 = arith.constant 0.000000e+00 : f32
    %101 = vector.broadcast %cst_33 : f32 to vector<2x1x144xf32>
    %c0_34 = arith.constant 0 : index
    %c0_35 = arith.constant 0 : index
    %c0_36 = arith.constant 0 : index
    %102 = vector.load %arg14[%c0_34, %c0_35, %c0_36] : memref<2x18x144xf32, #tpu.memory_space<vmem>>, vector<2x1x144xf32>
    tpu.vector_store %arg14[%c0_34, %c0_35, %c0_36], %101 {strides = array<i32>} : memref<2x18x144xf32, #tpu.memory_space<vmem>>, vector<2x1x144xf32>,
    %c0_37 = arith.constant 0 : index
    %c17 = arith.constant 17 : index
    %c0_38 = arith.constant 0 : index
    %103 = vector.load %arg14[%c0_37, %c17, %c0_38] : memref<2x18x144xf32, #tpu.memory_space<vmem>>, vector<2x1x144xf32>
    tpu.vector_store %arg14[%c0_37, %c17, %c0_38], %101 {strides = array<i32>} : memref<2x18x144xf32, #tpu.memory_space<vmem>>, vector<2x1x144xf32>,
    %104 = vector.shape_cast %100 : vector<32x144xf32> to vector<2x16x144xf32>
    %c0_39 = arith.constant 0 : index
    %c1 = arith.constant 1 : index
    %c0_40 = arith.constant 0 : index
    %105 = vector.load %arg14[%c0_39, %c1, %c0_40] : memref<2x18x144xf32, #tpu.memory_space<vmem>>, vector<2x16x144xf32>
    tpu.vector_store %arg14[%c0_39, %c1, %c0_40], %104 {strides = array<i32>} : memref<2x18x144xf32, #tpu.memory_space<vmem>>, vector<2x16x144xf32>,
    %c0_41 = arith.constant 0 : index
    %c0_42 = arith.constant 0 : index
    %c0_43 = arith.constant 0 : index
    %106 = vector.load %arg14[%c0_41, %c0_42, %c0_43] : memref<2x18x144xf32, #tpu.memory_space<vmem>>, vector<2x18x144xf32>
    %cst_44 = arith.constant 0.000000e+00 : f32
    %107 = vector.broadcast %cst_44 : f32 to vector<2x16x128xf32>
    %108 = vector.extract_strided_slice %106 {offsets = [0, 0, 0], sizes = [2, 18, 128], strides = [1, 1, 1]} : vector<2x18x144xf32> to vector<2x18x128xf32>
    %109 = vector.extract_strided_slice %108 {offsets = [0, 0, 0], sizes = [2, 16, 128], strides = [1, 1, 1]} : vector<2x18x128xf32> to vector<2x16x128xf32>
    %110 = vector.extract_strided_slice %1 {offsets = [0, 0], sizes = [1, 128], strides = [1, 1]} : vector<9x128xf32> to vector<1x128xf32>
    %111 = vector.shape_cast %110 : vector<1x128xf32> to vector<1x1x128xf32>
    %112 = vector.broadcast %111 : vector<1x1x128xf32> to vector<2x16x128xf32>
    %113 = arith.mulf %109, %112 : vector<2x16x128xf32>
    %114 = arith.addf %107, %113 : vector<2x16x128xf32>
    %115 = vector.extract_strided_slice %108 {offsets = [0, 1, 0], sizes = [2, 16, 128], strides = [1, 1, 1]} : vector<2x18x128xf32> to vector<2x16x128xf32>
    %116 = vector.extract_strided_slice %1 {offsets = [3, 0], sizes = [1, 128], strides = [1, 1]} : vector<9x128xf32> to vector<1x128xf32>
    %117 = vector.shape_cast %116 : vector<1x128xf32> to vector<1x1x128xf32>
    %118 = vector.broadcast %117 : vector<1x1x128xf32> to vector<2x16x128xf32>
    %119 = arith.mulf %115, %118 : vector<2x16x128xf32>
    %120 = arith.addf %114, %119 : vector<2x16x128xf32>
    %121 = vector.extract_strided_slice %108 {offsets = [0, 2, 0], sizes = [2, 16, 128], strides = [1, 1, 1]} : vector<2x18x128xf32> to vector<2x16x128xf32>
    %122 = vector.extract_strided_slice %1 {offsets = [6, 0], sizes = [1, 128], strides = [1, 1]} : vector<9x128xf32> to vector<1x128xf32>
    %123 = vector.shape_cast %122 : vector<1x128xf32> to vector<1x1x128xf32>
    %124 = vector.broadcast %123 : vector<1x1x128xf32> to vector<2x16x128xf32>
    %125 = arith.mulf %121, %124 : vector<2x16x128xf32>
    %126 = arith.addf %120, %125 : vector<2x16x128xf32>
    %127 = vector.extract_strided_slice %106 {offsets = [0, 0, 8], sizes = [2, 18, 128], strides = [1, 1, 1]} : vector<2x18x144xf32> to vector<2x18x128xf32>
    %128 = vector.extract_strided_slice %127 {offsets = [0, 0, 0], sizes = [2, 16, 128], strides = [1, 1, 1]} : vector<2x18x128xf32> to vector<2x16x128xf32>
    %129 = vector.extract_strided_slice %1 {offsets = [1, 0], sizes = [1, 128], strides = [1, 1]} : vector<9x128xf32> to vector<1x128xf32>
    %130 = vector.shape_cast %129 : vector<1x128xf32> to vector<1x1x128xf32>
    %131 = vector.broadcast %130 : vector<1x1x128xf32> to vector<2x16x128xf32>
    %132 = arith.mulf %128, %131 : vector<2x16x128xf32>
    %133 = arith.addf %126, %132 : vector<2x16x128xf32>
    %134 = vector.extract_strided_slice %127 {offsets = [0, 1, 0], sizes = [2, 16, 128], strides = [1, 1, 1]} : vector<2x18x128xf32> to vector<2x16x128xf32>
    %135 = vector.extract_strided_slice %1 {offsets = [4, 0], sizes = [1, 128], strides = [1, 1]} : vector<9x128xf32> to vector<1x128xf32>
    %136 = vector.shape_cast %135 : vector<1x128xf32> to vector<1x1x128xf32>
    %137 = vector.broadcast %136 : vector<1x1x128xf32> to vector<2x16x128xf32>
    %138 = arith.mulf %134, %137 : vector<2x16x128xf32>
    %139 = arith.addf %133, %138 : vector<2x16x128xf32>
    %140 = vector.extract_strided_slice %127 {offsets = [0, 2, 0], sizes = [2, 16, 128], strides = [1, 1, 1]} : vector<2x18x128xf32> to vector<2x16x128xf32>
    %141 = vector.extract_strided_slice %1 {offsets = [7, 0], sizes = [1, 128], strides = [1, 1]} : vector<9x128xf32> to vector<1x128xf32>
    %142 = vector.shape_cast %141 : vector<1x128xf32> to vector<1x1x128xf32>
    %143 = vector.broadcast %142 : vector<1x1x128xf32> to vector<2x16x128xf32>
    %144 = arith.mulf %140, %143 : vector<2x16x128xf32>
    %145 = arith.addf %139, %144 : vector<2x16x128xf32>
    %146 = vector.extract_strided_slice %106 {offsets = [0, 0, 16], sizes = [2, 18, 128], strides = [1, 1, 1]} : vector<2x18x144xf32> to vector<2x18x128xf32>
    %147 = vector.extract_strided_slice %146 {offsets = [0, 0, 0], sizes = [2, 16, 128], strides = [1, 1, 1]} : vector<2x18x128xf32> to vector<2x16x128xf32>
    %148 = vector.extract_strided_slice %1 {offsets = [2, 0], sizes = [1, 128], strides = [1, 1]} : vector<9x128xf32> to vector<1x128xf32>
    %149 = vector.shape_cast %148 : vector<1x128xf32> to vector<1x1x128xf32>
    %150 = vector.broadcast %149 : vector<1x1x128xf32> to vector<2x16x128xf32>
    %151 = arith.mulf %147, %150 : vector<2x16x128xf32>
    %152 = arith.addf %145, %151 : vector<2x16x128xf32>
    %153 = vector.extract_strided_slice %146 {offsets = [0, 1, 0], sizes = [2, 16, 128], strides = [1, 1, 1]} : vector<2x18x128xf32> to vector<2x16x128xf32>
    %154 = vector.extract_strided_slice %1 {offsets = [5, 0], sizes = [1, 128], strides = [1, 1]} : vector<9x128xf32> to vector<1x128xf32>
    %155 = vector.shape_cast %154 : vector<1x128xf32> to vector<1x1x128xf32>
    %156 = vector.broadcast %155 : vector<1x1x128xf32> to vector<2x16x128xf32>
    %157 = arith.mulf %153, %156 : vector<2x16x128xf32>
    %158 = arith.addf %152, %157 : vector<2x16x128xf32>
    %159 = vector.extract_strided_slice %146 {offsets = [0, 2, 0], sizes = [2, 16, 128], strides = [1, 1, 1]} : vector<2x18x128xf32> to vector<2x16x128xf32>
    %160 = vector.extract_strided_slice %1 {offsets = [8, 0], sizes = [1, 128], strides = [1, 1]} : vector<9x128xf32> to vector<1x128xf32>
    %161 = vector.shape_cast %160 : vector<1x128xf32> to vector<1x1x128xf32>
    %162 = vector.broadcast %161 : vector<1x1x128xf32> to vector<2x16x128xf32>
    %163 = arith.mulf %159, %162 : vector<2x16x128xf32>
    %164 = arith.addf %158, %163 : vector<2x16x128xf32>
    %165 = vector.shape_cast %164 : vector<2x16x128xf32> to vector<32x128xf32>
    %c0_45 = arith.constant 0 : index
    %c0_46 = arith.constant 0 : index
    %166 = vector.load %arg8[%c0_45, %c0_46] : memref<128x256xf32, #tpu.memory_space<vmem>>, vector<128x256xf32>
    %cst_47 = arith.constant dense<0.000000e+00> : vector<32x256xf32>
    %167 = tpu.matmul %165, %166, %cst_47 {dimension_numbers = #tpu.dot_dimension_numbers<[1], [0], [0], [1], [0, 0, 1, 1], [], []>} : vector<32x128xf32>, vector<128x256xf32>, vector<32x256xf32> -> vector<32x256xf32>
    %cst_48 = arith.constant dense<0.000000e+00> : vector<256xf32>
    %168 = vector.multi_reduction <add>, %167, %cst_48 [0] : vector<32x256xf32> to vector<256xf32>
    %169 = vector.shape_cast %168 : vector<256xf32> to vector<1x256xf32>
    %170 = arith.mulf %167, %167 : vector<32x256xf32>
    %cst_49 = arith.constant dense<0.000000e+00> : vector<256xf32>
    %171 = vector.multi_reduction <add>, %170, %cst_49 [0] : vector<32x256xf32> to vector<256xf32>
    %172 = vector.shape_cast %171 : vector<256xf32> to vector<1x256xf32>
    %c0_50 = arith.constant 0 : index
    %c0_51 = arith.constant 0 : index
    %173 = vector.load %arg13[%c0_50, %c0_51] : memref<32x256xf32, #tpu.memory_space<vmem>>, vector<32x256xf32>
    tpu.vector_store %arg13[%c0_50, %c0_51], %167 {strides = array<i32>} : memref<32x256xf32, #tpu.memory_space<vmem>>, vector<32x256xf32>,
    %c0_52 = arith.constant 0 : index
    %c0_53 = arith.constant 0 : index
    %174 = vector.load %arg9[%c0_52, %c0_53] : memref<256x16xf32, #tpu.memory_space<vmem>>, vector<256x16xf32>
    %cst_54 = arith.constant dense<0.000000e+00> : vector<1x16xf32>
    %175 = tpu.matmul %169, %174, %cst_54 {dimension_numbers = #tpu.dot_dimension_numbers<[1], [0], [0], [1], [0, 0, 1, 1], [], []>} : vector<1x256xf32>, vector<256x16xf32>, vector<1x16xf32> -> vector<1x16xf32>
    %c0_55 = arith.constant 0 : index
    %c0_56 = arith.constant 0 : index
    %176 = vector.load %arg9[%c0_55, %c0_56] : memref<256x16xf32, #tpu.memory_space<vmem>>, vector<256x16xf32>
    %cst_57 = arith.constant dense<0.000000e+00> : vector<1x16xf32>
    %177 = tpu.matmul %172, %176, %cst_57 {dimension_numbers = #tpu.dot_dimension_numbers<[1], [0], [0], [1], [0, 0, 1, 1], [], []>} : vector<1x256xf32>, vector<256x16xf32>, vector<1x16xf32> -> vector<1x16xf32>
    %cst_58 = arith.constant 5.120000e+02 : f32
    %178 = vector.broadcast %cst_58 : f32 to vector<1x16xf32>
    %179 = arith.divf %175, %178 : vector<1x16xf32>
    %cst_59 = arith.constant 5.120000e+02 : f32
    %180 = vector.broadcast %cst_59 : f32 to vector<1x16xf32>
    %181 = arith.divf %177, %180 : vector<1x16xf32>
    %182 = arith.mulf %179, %179 : vector<1x16xf32>
    %183 = arith.subf %181, %182 : vector<1x16xf32>
    %cst_60 = arith.constant 0.000000e+00 : f32
    %184 = vector.broadcast %cst_60 : f32 to vector<1x16xf32>
    %185 = arith.maximumf %183, %184 : vector<1x16xf32>
    %c0_61 = arith.constant 0 : index
    %c0_62 = arith.constant 0 : index
    %186 = vector.load %arg11[%c0_61, %c0_62] : memref<1x16xf32, #tpu.memory_space<vmem>>, vector<1x16xf32>
    %cst_63 = arith.constant 9.99999974E-6 : f32
    %187 = vector.broadcast %cst_63 : f32 to vector<1x16xf32>
    %188 = arith.addf %185, %187 : vector<1x16xf32>
    %189 = math.rsqrt %188 : vector<1x16xf32>
    %190 = arith.mulf %186, %189 : vector<1x16xf32>
    %c0_64 = arith.constant 0 : index
    %c0_65 = arith.constant 0 : index
    %191 = vector.load %arg12[%c0_64, %c0_65] : memref<1x16xf32, #tpu.memory_space<vmem>>, vector<1x16xf32>
    %192 = arith.mulf %179, %190 : vector<1x16xf32>
    %193 = arith.subf %191, %192 : vector<1x16xf32>
    %c0_66 = arith.constant 0 : index
    %c0_67 = arith.constant 0 : index
    %194 = vector.load %arg10[%c0_66, %c0_67] : memref<16x256xf32, #tpu.memory_space<vmem>>, vector<16x256xf32>
    %cst_68 = arith.constant dense<0.000000e+00> : vector<1x256xf32>
    %195 = tpu.matmul %190, %194, %cst_68 {dimension_numbers = #tpu.dot_dimension_numbers<[1], [0], [0], [1], [0, 0, 1, 1], [], []>} : vector<1x16xf32>, vector<16x256xf32>, vector<1x256xf32> -> vector<1x256xf32>
    %c0_69 = arith.constant 0 : index
    %c0_70 = arith.constant 0 : index
    %196 = vector.load %arg10[%c0_69, %c0_70] : memref<16x256xf32, #tpu.memory_space<vmem>>, vector<16x256xf32>
    %cst_71 = arith.constant dense<0.000000e+00> : vector<1x256xf32>
    %197 = tpu.matmul %193, %196, %cst_71 {dimension_numbers = #tpu.dot_dimension_numbers<[1], [0], [0], [1], [0, 0, 1, 1], [], []>} : vector<1x16xf32>, vector<16x256xf32>, vector<1x256xf32> -> vector<1x256xf32>
    %c0_72 = arith.constant 0 : index
    %c0_73 = arith.constant 0 : index
    %198 = vector.load %arg13[%c0_72, %c0_73] : memref<32x256xf32, #tpu.memory_space<vmem>>, vector<32x256xf32>
    %199 = vector.broadcast %195 : vector<1x256xf32> to vector<32x256xf32>
    %200 = arith.mulf %198, %199 : vector<32x256xf32>
    %201 = vector.broadcast %197 : vector<1x256xf32> to vector<32x256xf32>
    %202 = arith.addf %200, %201 : vector<32x256xf32>
    %c0_74 = arith.constant 0 : index
    %c0_75 = arith.constant 0 : index
    %203 = vector.load %arg13[%c0_74, %c0_75] : memref<32x256xf32, #tpu.memory_space<vmem>>, vector<32x256xf32>
    tpu.vector_store %arg13[%c0_74, %c0_75], %202 {strides = array<i32>} : memref<32x256xf32, #tpu.memory_space<vmem>>, vector<32x256xf32>,
    return
  }
}

</mosaic_0001>

<llo_original>
// kernel: sep_conv.1
$region0: #{sep_conv.1}
  #allocation0 [shape = 'u32[]', space=smem, size = 0x4, offset = 0x4, fixed_abs, tag = 'smem constant byte address 0x4 - core index']
  #allocation1 [shape = 'u32[144,128]{1,0:T(1,128)}', space=vmem, size = 0x12000, scoped, tag = 'internal scratch']
  #allocation2 [shape = 'f32[2,18,144]{2,1,0:T(8,128)}', space=vmem, size = 0xc000, scoped, tag = 'scratch operand']
  %s0 = inlined_call_operand.vmem [shape: f32[2,18,144], index: 0, kind: input, shape index: {}]
  %s1 = inlined_call_operand.vmem [shape: f32[9,128], index: 1, kind: input, shape index: {}]
  %s2 = inlined_call_operand.vmem [shape: f32[128,144], index: 2, kind: input, shape index: {}]
  %s3 = inlined_call_operand.vmem [shape: f32[144,8], index: 3, kind: input, shape index: {}]
  %s4 = inlined_call_operand.vmem [shape: f32[8,144], index: 4, kind: input, shape index: {}]
  %s5 = inlined_call_operand.vmem [shape: f32[1,8], index: 5, kind: input, shape index: {}]
  %s6 = inlined_call_operand.vmem [shape: f32[1,8], index: 6, kind: input, shape index: {}]
  %s7 = inlined_call_operand.vmem [shape: f32[9,128], index: 7, kind: input, shape index: {}]
  %s8 = inlined_call_operand.vmem [shape: f32[128,256], index: 8, kind: input, shape index: {}]
  %s9 = inlined_call_operand.vmem [shape: f32[256,16], index: 9, kind: input, shape index: {}]
  %s10 = inlined_call_operand.vmem [shape: f32[16,256], index: 10, kind: input, shape index: {}]
  %s11 = inlined_call_operand.vmem [shape: f32[1,16], index: 11, kind: input, shape index: {}]
  %s12 = inlined_call_operand.vmem [shape: f32[1,16], index: 12, kind: input, shape index: {}]
  %s13 = inlined_call_operand.vmem [shape: f32[32,256], index: 13, kind: output, shape index: {}]
  %s14 = sld [smem:[#allocation0]]
  $region62: #{sep_conv.1} parent=0
    _
  %s16 = ssub.s32 1, %s14
  %s17 = scalar_select 0, %s16, %s14
  // Predicated region
  $region2: #{sep_conv.1} parent=0 // pred_check
    _
  $region3: #{sep_conv.1} parent=0 // pred_check_branch
    %19 = sbr.rel (0) target = $region5
  $region4: #{sep_conv.1} parent=0 // pred_region
    _
  $region5: #{sep_conv.1} parent=0 // pred_fallthru
    _
  // Predicated region
  $region6: #{sep_conv.1} parent=0 // pred_check
    _
  $region7: #{sep_conv.1} parent=0 // pred_check_branch
    %21 = sbr.rel (0) target = $region9
  $region8: #{sep_conv.1} parent=0 // pred_region
    _
  $region9: #{sep_conv.1} parent=0 // pred_fallthru
    _
  // Predicated region
  $region10: #{sep_conv.1} parent=0 // pred_check
    _
  $region11: #{sep_conv.1} parent=0 // pred_check_branch
    %23 = sbr.rel (0) target = $region13
  $region12: #{sep_conv.1} parent=0 // pred_region
    _
  $region13: #{sep_conv.1} parent=0 // pred_fallthru
    _
  // Predicated region
  $region14: #{sep_conv.1} parent=0 // pred_check
    _
  $region15: #{sep_conv.1} parent=0 // pred_check_branch
    %25 = sbr.rel (0) target = $region17
  $region16: #{sep_conv.1} parent=0 // pred_region
    _
  $region17: #{sep_conv.1} parent=0 // pred_fallthru
    _
  // Predicated region
  $region18: #{sep_conv.1} parent=0 // pred_check
    _
  $region19: #{sep_conv.1} parent=0 // pred_check_branch
    %27 = sbr.rel (0) target = $region21
  $region20: #{sep_conv.1} parent=0 // pred_region
    _
  $region21: #{sep_conv.1} parent=0 // pred_fallthru
    _
  // Predicated region
  $region22: #{sep_conv.1} parent=0 // pred_check
    _
  $region23: #{sep_conv.1} parent=0 // pred_check_branch
    %29 = sbr.rel (0) target = $region25
  $region24: #{sep_conv.1} parent=0 // pred_region
    _
  $region25: #{sep_conv.1} parent=0 // pred_fallthru
    _
  // Predicated region
  $region26: #{sep_conv.1} parent=0 // pred_check
    _
  $region27: #{sep_conv.1} parent=0 // pred_check_branch
    %31 = sbr.rel (0) target = $region29
  $region28: #{sep_conv.1} parent=0 // pred_region
    _
  $region29: #{sep_conv.1} parent=0 // pred_fallthru
    _
  // Predicated region
  $region30: #{sep_conv.1} parent=0 // pred_check
    _
  $region31: #{sep_conv.1} parent=0 // pred_check_branch
    %33 = sbr.rel (0) target = $region33
  $region32: #{sep_conv.1} parent=0 // pred_region
    _
  $region33: #{sep_conv.1} parent=0 // pred_fallthru
    _
  // Predicated region
  $region34: #{sep_conv.1} parent=0 // pred_check
    _
  $region35: #{sep_conv.1} parent=0 // pred_check_branch
    %35 = sbr.rel (0) target = $region37
  $region36: #{sep_conv.1} parent=0 // pred_region
    _
  $region37: #{sep_conv.1} parent=0 // pred_fallthru
    _
  // Predicated region
  $region38: #{sep_conv.1} parent=0 // pred_check
    _
  $region39: #{sep_conv.1} parent=0 // pred_check_branch
    %37 = sbr.rel (0) target = $region41
  $region40: #{sep_conv.1} parent=0 // pred_region
    _
  $region41: #{sep_conv.1} parent=0 // pred_fallthru
    _
  // Predicated region
  $region42: #{sep_conv.1} parent=0 // pred_check
    _
  $region43: #{sep_conv.1} parent=0 // pred_check_branch
    %39 = sbr.rel (0) target = $region45
  $region44: #{sep_conv.1} parent=0 // pred_region
    _
  $region45: #{sep_conv.1} parent=0 // pred_fallthru
    _
  // Predicated region
  $region46: #{sep_conv.1} parent=0 // pred_check
    _
  $region47: #{sep_conv.1} parent=0 // pred_check_branch
    %41 = sbr.rel (0) target = $region49
  $region48: #{sep_conv.1} parent=0 // pred_region
    _
  $region49: #{sep_conv.1} parent=0 // pred_fallthru
    _
  // Predicated region
  $region50: #{sep_conv.1} parent=0 // pred_check
    _
  $region51: #{sep_conv.1} parent=0 // pred_check_branch
    %43 = sbr.rel (0) target = $region53
  $region52: #{sep_conv.1} parent=0 // pred_region
    _
  $region53: #{sep_conv.1} parent=0 // pred_fallthru
    _
  %v44 = vld [vmem:[%s1] sm:$0xff]
  %v45 = vld [vmem:[%s1 + $0x8] sm:$0x1]
  %v46 = vld [vmem:[%s7] sm:$0xff]
  %v47 = vld [vmem:[%s7 + $0x8] sm:$0x1]
  %v48 = vld [vmem:[%s0] sm:$0xff]
  %v49 = vld [vmem:[%s0 + $0x8] sm:$0xff]
  %v50 = vld [vmem:[%s0 + $0x10] sm:$0xff]
  %v51 = vld [vmem:[%s0 + $0x18] sm:$0xff]
  %v52 = vld [vmem:[%s0 + $0x20] sm:$0x3]
  %v53 = vld [vmem:[%s0 + $0x28] sm:$0x3]
  %v54 = vld [vmem:[%s0 + $0x30] sm:$0xff]
  %v55 = vld [vmem:[%s0 + $0x38] sm:$0xff]
  %v56 = vld [vmem:[%s0 + $0x40] sm:$0xff]
  %v57 = vld [vmem:[%s0 + $0x48] sm:$0xff]
  %v58 = vld [vmem:[%s0 + $0x50] sm:$0x3]
  %v59 = vld [vmem:[%s0 + $0x58] sm:$0x3]
  %v60 = vmax.f32 %v48, 0.0
  %v61 = vmax.f32 %v49, 0.0
  %v62 = vmax.f32 %v50, 0.0
  %v63 = vmax.f32 %v51, 0.0
  %v64 = vmax.f32 %v52, 0.0
  %v65 = vmax.f32 %v53, 0.0
  %v66 = vmax.f32 %v54, 0.0
  %v67 = vmax.f32 %v55, 0.0
  %v68 = vmax.f32 %v56, 0.0
  %v69 = vmax.f32 %v57, 0.0
  %v70 = vmax.f32 %v58, 0.0
  %v71 = vmax.f32 %v59, 0.0
  %v72 = vlaneseq
  %v73 = vshrl.u32 %v72, 7
  %v74 = vsub.s32 0, %v73
  %v75 = vrot.slane %v44, %v74
  %v76 = vmul.f32 %v60, %v75
  %v77 = vmul.f32 %v62, %v75
  %v78 = vmul.f32 %v66, %v75
  %v79 = vmul.f32 %v68, %v75
  %v80 = vadd.f32 %v76, 0.0
  %v81 = vadd.f32 %v77, 0.0
  %v82 = vadd.f32 %v78, 0.0
  %v83 = vadd.f32 %v79, 0.0
  %v84 = vlaneseq
  %v85 = vshrl.u32 %v84, 7
  %v86 = vsub.s32 3, %v85
  %v87 = vrot.slane %v44, %v86
  %v88 = vmul.f32 %v60, %v87
  %v89 = vmul.f32 %v62, %v87
  %v90 = vmul.f32 %v64, %v87
  %v91 = vmul.f32 %v66, %v87
  %v92 = vmul.f32 %v68, %v87
  %v93 = vmul.f32 %v70, %v87
  %vm100 = vcmask 1046528
  %v101 = vrot.slane %v88, 1
  %v102 = vrot.slane %v89, 1
  %v103 = vsel %vm100, %v101, %v102
  %v104 = vrot.slane %v90, 1
  %v105 = vsel %vm100, %v102, %v104
  %v106 = vrot.slane %v91, 1
  %v107 = vrot.slane %v92, 1
  %v108 = vsel %vm100, %v106, %v107
  %v109 = vrot.slane %v93, 1
  %v110 = vsel %vm100, %v107, %v109
  %v115 = vadd.f32 %v80, %v103
  %v116 = vadd.f32 %v81, %v105
  %v117 = vadd.f32 %v82, %v108
  %v118 = vadd.f32 %v83, %v110
  %v119 = vlaneseq
  %v120 = vshrl.u32 %v119, 7
  %v121 = vsub.s32 6, %v120
  %v122 = vrot.slane %v44, %v121
  %v123 = vmul.f32 %v60, %v122
  %v124 = vmul.f32 %v62, %v122
  %v125 = vmul.f32 %v64, %v122
  %v126 = vmul.f32 %v66, %v122
  %v127 = vmul.f32 %v68, %v122
  %v128 = vmul.f32 %v70, %v122
  %vm135 = vcmask 1045504
  %v136 = vrot.slane %v123, 2
  %v137 = vrot.slane %v124, 2
  %v138 = vsel %vm135, %v136, %v137
  %v139 = vrot.slane %v125, 2
  %v140 = vsel %vm135, %v137, %v139
  %v141 = vrot.slane %v126, 2
  %v142 = vrot.slane %v127, 2
  %v143 = vsel %vm135, %v141, %v142
  %v144 = vrot.slane %v128, 2
  %v145 = vsel %vm135, %v142, %v144
  %v150 = vadd.f32 %v115, %v138
  %v151 = vadd.f32 %v116, %v140
  %v152 = vadd.f32 %v117, %v143
  %v153 = vadd.f32 %v118, %v145
  %v154 = vlaneseq
  %v155 = vshrl.u32 %v154, 7
  %v156 = vsub.s32 1, %v155
  %v157 = vrot.slane %v44, %v156
  %159 = vrot.lane.b32.xlu0 %v157, 8
  %v160 = vpop.permute.xlu0 %159
  %v162 = vmul.f32 %v60, %v160
  %v163 = vmul.f32 %v61, %v160
  %v164 = vmul.f32 %v62, %v160
  %v165 = vmul.f32 %v63, %v160
  %v166 = vmul.f32 %v66, %v160
  %v167 = vmul.f32 %v67, %v160
  %v168 = vmul.f32 %v68, %v160
  %v169 = vmul.f32 %v69, %v160
  %178 = vrot.lane.b32.xlu0 %v162, 120
  %v179 = vpop.permute.xlu0 %178
  %180 = vrot.lane.b32.xlu0 %v163, 120
  %v181 = vpop.permute.xlu0 %180
  %182 = vrot.lane.b32.xlu0 %v164, 120
  %v183 = vpop.permute.xlu0 %182
  %184 = vrot.lane.b32.xlu0 %v165, 120
  %v185 = vpop.permute.xlu0 %184
  %186 = vrot.lane.b32.xlu0 %v166, 120
  %v187 = vpop.permute.xlu0 %186
  %188 = vrot.lane.b32.xlu0 %v167, 120
  %v189 = vpop.permute.xlu0 %188
  %190 = vrot.lane.b32.xlu0 %v168, 120
  %v191 = vpop.permute.xlu0 %190
  %192 = vrot.lane.b32.xlu0 %v169, 120
  %v193 = vpop.permute.xlu0 %192
  %vm194 = vcmask 982016
  %v195 = vsel %vm194, %v179, %v181
  %v196 = vsel %vm194, %v183, %v185
  %v197 = vsel %vm194, %v187, %v189
  %v198 = vsel %vm194, %v191, %v193
  %v203 = vadd.f32 %v150, %v195
  %v204 = vadd.f32 %v151, %v196
  %v205 = vadd.f32 %v152, %v197
  %v206 = vadd.f32 %v153, %v198
  %v207 = vlaneseq
  %v208 = vshrl.u32 %v207, 7
  %v209 = vsub.s32 4, %v208
  %v210 = vrot.slane %v44, %v209
  %212 = vrot.lane.b32.xlu0 %v210, 8
  %v213 = vpop.permute.xlu0 %212
  %v215 = vmul.f32 %v60, %v213
  %v216 = vmul.f32 %v61, %v213
  %v217 = vmul.f32 %v62, %v213
  %v218 = vmul.f32 %v63, %v213
  %v219 = vmul.f32 %v64, %v213
  %v220 = vmul.f32 %v65, %v213
  %v221 = vmul.f32 %v66, %v213
  %v222 = vmul.f32 %v67, %v213
  %v223 = vmul.f32 %v68, %v213
  %v224 = vmul.f32 %v69, %v213
  %v225 = vmul.f32 %v70, %v213
  %v226 = vmul.f32 %v71, %v213
  %v239 = vrot.slane %v215, 1
  %v240 = vrot.slane %v217, 1
  %v241 = vsel %vm100, %v239, %v240
  %v242 = vrot.slane %v216, 1
  %v243 = vrot.slane %v218, 1
  %v244 = vsel %vm100, %v242, %v243
  %v245 = vrot.slane %v219, 1
  %v246 = vsel %vm100, %v240, %v245
  %v247 = vrot.slane %v220, 1
  %v248 = vsel %vm100, %v243, %v247
  %v249 = vrot.slane %v221, 1
  %v250 = vrot.slane %v223, 1
  %v251 = vsel %vm100, %v249, %v250
  %v252 = vrot.slane %v222, 1
  %v253 = vrot.slane %v224, 1
  %v254 = vsel %vm100, %v252, %v253
  %v255 = vrot.slane %v225, 1
  %v256 = vsel %vm100, %v250, %v255
  %v257 = vrot.slane %v226, 1
  %v258 = vsel %vm100, %v253, %v257
  %259 = vrot.lane.b32.xlu0 %v241, 120
  %v260 = vpop.permute.xlu0 %259
  %261 = vrot.lane.b32.xlu0 %v244, 120
  %v262 = vpop.permute.xlu0 %261
  %263 = vrot.lane.b32.xlu0 %v246, 120
  %v264 = vpop.permute.xlu0 %263
  %265 = vrot.lane.b32.xlu0 %v248, 120
  %v266 = vpop.permute.xlu0 %265
  %267 = vrot.lane.b32.xlu0 %v251, 120
  %v268 = vpop.permute.xlu0 %267
  %269 = vrot.lane.b32.xlu0 %v254, 120
  %v270 = vpop.permute.xlu0 %269
  %271 = vrot.lane.b32.xlu0 %v256, 120
  %v272 = vpop.permute.xlu0 %271
  %273 = vrot.lane.b32.xlu0 %v258, 120
  %v274 = vpop.permute.xlu0 %273
  %v275 = vsel %vm194, %v260, %v262
  %v276 = vsel %vm194, %v264, %v266
  %v277 = vsel %vm194, %v268, %v270
  %v278 = vsel %vm194, %v272, %v274
  %v283 = vadd.f32 %v203, %v275
  %v284 = vadd.f32 %v204, %v276
  %v285 = vadd.f32 %v205, %v277
  %v286 = vadd.f32 %v206, %v278
  %v287 = vlaneseq
  %v288 = vshrl.u32 %v287, 7
  %v289 = vsub.s32 7, %v288
  %v290 = vrot.slane %v44, %v289
  %292 = vrot.lane.b32.xlu0 %v290, 8
  %v293 = vpop.permute.xlu0 %292
  %v295 = vmul.f32 %v60, %v293
  %v296 = vmul.f32 %v61, %v293
  %v297 = vmul.f32 %v62, %v293
  %v298 = vmul.f32 %v63, %v293
  %v299 = vmul.f32 %v64, %v293
  %v300 = vmul.f32 %v65, %v293
  %v301 = vmul.f32 %v66, %v293
  %v302 = vmul.f32 %v67, %v293
  %v303 = vmul.f32 %v68, %v293
  %v304 = vmul.f32 %v69, %v293
  %v305 = vmul.f32 %v70, %v293
  %v306 = vmul.f32 %v71, %v293
  %v319 = vrot.slane %v295, 2
  %v320 = vrot.slane %v297, 2
  %v321 = vsel %vm135, %v319, %v320
  %v322 = vrot.slane %v296, 2
  %v323 = vrot.slane %v298, 2
  %v324 = vsel %vm135, %v322, %v323
  %v325 = vrot.slane %v299, 2
  %v326 = vsel %vm135, %v320, %v325
  %v327 = vrot.slane %v300, 2
  %v328 = vsel %vm135, %v323, %v327
  %v329 = vrot.slane %v301, 2
  %v330 = vrot.slane %v303, 2
  %v331 = vsel %vm135, %v329, %v330
  %v332 = vrot.slane %v302, 2
  %v333 = vrot.slane %v304, 2
  %v334 = vsel %vm135, %v332, %v333
  %v335 = vrot.slane %v305, 2
  %v336 = vsel %vm135, %v330, %v335
  %v337 = vrot.slane %v306, 2
  %v338 = vsel %vm135, %v333, %v337
  %339 = vrot.lane.b32.xlu0 %v321, 120
  %v340 = vpop.permute.xlu0 %339
  %341 = vrot.lane.b32.xlu0 %v324, 120
  %v342 = vpop.permute.xlu0 %341
  %343 = vrot.lane.b32.xlu0 %v326, 120
  %v344 = vpop.permute.xlu0 %343
  %345 = vrot.lane.b32.xlu0 %v328, 120
  %v346 = vpop.permute.xlu0 %345
  %347 = vrot.lane.b32.xlu0 %v331, 120
  %v348 = vpop.permute.xlu0 %347
  %349 = vrot.lane.b32.xlu0 %v334, 120
  %v350 = vpop.permute.xlu0 %349
  %351 = vrot.lane.b32.xlu0 %v336, 120
  %v352 = vpop.permute.xlu0 %351
  %353 = vrot.lane.b32.xlu0 %v338, 120
  %v354 = vpop.permute.xlu0 %353
  %v355 = vsel %vm194, %v340, %v342
  %v356 = vsel %vm194, %v344, %v346
  %v357 = vsel %vm194, %v348, %v350
  %v358 = vsel %vm194, %v352, %v354
  %v363 = vadd.f32 %v283, %v355
  %v364 = vadd.f32 %v284, %v356
  %v365 = vadd.f32 %v285, %v357
  %v366 = vadd.f32 %v286, %v358
  %v367 = vlaneseq
  %v368 = vshrl.u32 %v367, 7
  %v369 = vsub.s32 2, %v368
  %v370 = vrot.slane %v44, %v369
  %372 = vrot.lane.b32.xlu0 %v370, 16
  %v373 = vpop.permute.xlu0 %372
  %v375 = vmul.f32 %v60, %v373
  %v376 = vmul.f32 %v61, %v373
  %v377 = vmul.f32 %v62, %v373
  %v378 = vmul.f32 %v63, %v373
  %v379 = vmul.f32 %v66, %v373
  %v380 = vmul.f32 %v67, %v373
  %v381 = vmul.f32 %v68, %v373
  %v382 = vmul.f32 %v69, %v373
  %391 = vrot.lane.b32.xlu0 %v375, 112
  %v392 = vpop.permute.xlu0 %391
  %393 = vrot.lane.b32.xlu0 %v376, 112
  %v394 = vpop.permute.xlu0 %393
  %395 = vrot.lane.b32.xlu0 %v377, 112
  %v396 = vpop.permute.xlu0 %395
  %397 = vrot.lane.b32.xlu0 %v378, 112
  %v398 = vpop.permute.xlu0 %397
  %399 = vrot.lane.b32.xlu0 %v379, 112
  %v400 = vpop.permute.xlu0 %399
  %401 = vrot.lane.b32.xlu0 %v380, 112
  %v402 = vpop.permute.xlu0 %401
  %403 = vrot.lane.b32.xlu0 %v381, 112
  %v404 = vpop.permute.xlu0 %403
  %405 = vrot.lane.b32.xlu0 %v382, 112
  %v406 = vpop.permute.xlu0 %405
  %vm407 = vcmask 916480
  %v408 = vsel %vm407, %v392, %v394
  %v409 = vsel %vm407, %v396, %v398
  %v410 = vsel %vm407, %v400, %v402
  %v411 = vsel %vm407, %v404, %v406
  %v416 = vadd.f32 %v363, %v408
  %v417 = vadd.f32 %v364, %v409
  %v418 = vadd.f32 %v365, %v410
  %v419 = vadd.f32 %v366, %v411
  %v420 = vlaneseq
  %v421 = vshrl.u32 %v420, 7
  %v422 = vsub.s32 5, %v421
  %v423 = vrot.slane %v44, %v422
  %425 = vrot.lane.b32.xlu0 %v423, 16
  %v426 = vpop.permute.xlu0 %425
  %v428 = vmul.f32 %v60, %v426
  %v429 = vmul.f32 %v61, %v426
  %v430 = vmul.f32 %v62, %v426
  %v431 = vmul.f32 %v63, %v426
  %v432 = vmul.f32 %v64, %v426
  %v433 = vmul.f32 %v65, %v426
  %v434 = vmul.f32 %v66, %v426
  %v435 = vmul.f32 %v67, %v426
  %v436 = vmul.f32 %v68, %v426
  %v437 = vmul.f32 %v69, %v426
  %v438 = vmul.f32 %v70, %v426
  %v439 = vmul.f32 %v71, %v426
  %v452 = vrot.slane %v428, 1
  %v453 = vrot.slane %v430, 1
  %v454 = vsel %vm100, %v452, %v453
  %v455 = vrot.slane %v429, 1
  %v456 = vrot.slane %v431, 1
  %v457 = vsel %vm100, %v455, %v456
  %v458 = vrot.slane %v432, 1
  %v459 = vsel %vm100, %v453, %v458
  %v460 = vrot.slane %v433, 1
  %v461 = vsel %vm100, %v456, %v460
  %v462 = vrot.slane %v434, 1
  %v463 = vrot.slane %v436, 1
  %v464 = vsel %vm100, %v462, %v463
  %v465 = vrot.slane %v435, 1
  %v466 = vrot.slane %v437, 1
  %v467 = vsel %vm100, %v465, %v466
  %v468 = vrot.slane %v438, 1
  %v469 = vsel %vm100, %v463, %v468
  %v470 = vrot.slane %v439, 1
  %v471 = vsel %vm100, %v466, %v470
  %472 = vrot.lane.b32.xlu0 %v454, 112
  %v473 = vpop.permute.xlu0 %472
  %474 = vrot.lane.b32.xlu0 %v457, 112
  %v475 = vpop.permute.xlu0 %474
  %476 = vrot.lane.b32.xlu0 %v459, 112
  %v477 = vpop.permute.xlu0 %476
  %478 = vrot.lane.b32.xlu0 %v461, 112
  %v479 = vpop.permute.xlu0 %478
  %480 = vrot.lane.b32.xlu0 %v464, 112
  %v481 = vpop.permute.xlu0 %480
  %482 = vrot.lane.b32.xlu0 %v467, 112
  %v483 = vpop.permute.xlu0 %482
  %484 = vrot.lane.b32.xlu0 %v469, 112
  %v485 = vpop.permute.xlu0 %484
  %486 = vrot.lane.b32.xlu0 %v471, 112
  %v487 = vpop.permute.xlu0 %486
  %v488 = vsel %vm407, %v473, %v475
  %v489 = vsel %vm407, %v477, %v479
  %v490 = vsel %vm407, %v481, %v483
  %v491 = vsel %vm407, %v485, %v487
  %v496 = vadd.f32 %v416, %v488
  %v497 = vadd.f32 %v417, %v489
  %v498 = vadd.f32 %v418, %v490
  %v499 = vadd.f32 %v419, %v491
  %v500 = vlaneseq
  %v501 = vshrl.u32 %v500, 7
  %v502 = vsub.s32 0, %v501
  %v503 = vrot.slane %v45, %v502
  %505 = vrot.lane.b32.xlu0 %v503, 16
  %v506 = vpop.permute.xlu0 %505
  %v508 = vmul.f32 %v60, %v506
  %v509 = vmul.f32 %v61, %v506
  %v510 = vmul.f32 %v62, %v506
  %v511 = vmul.f32 %v63, %v506
  %v512 = vmul.f32 %v64, %v506
  %v513 = vmul.f32 %v65, %v506
  %v514 = vmul.f32 %v66, %v506
  %v515 = vmul.f32 %v67, %v506
  %v516 = vmul.f32 %v68, %v506
  %v517 = vmul.f32 %v69, %v506
  %v518 = vmul.f32 %v70, %v506
  %v519 = vmul.f32 %v71, %v506
  %v532 = vrot.slane %v508, 2
  %v533 = vrot.slane %v510, 2
  %v534 = vsel %vm135, %v532, %v533
  %v535 = vrot.slane %v509, 2
  %v536 = vrot.slane %v511, 2
  %v537 = vsel %vm135, %v535, %v536
  %v538 = vrot.slane %v512, 2
  %v539 = vsel %vm135, %v533, %v538
  %v540 = vrot.slane %v513, 2
  %v541 = vsel %vm135, %v536, %v540
  %v542 = vrot.slane %v514, 2
  %v543 = vrot.slane %v516, 2
  %v544 = vsel %vm135, %v542, %v543
  %v545 = vrot.slane %v515, 2
  %v546 = vrot.slane %v517, 2
  %v547 = vsel %vm135, %v545, %v546
  %v548 = vrot.slane %v518, 2
  %v549 = vsel %vm135, %v543, %v548
  %v550 = vrot.slane %v519, 2
  %v551 = vsel %vm135, %v546, %v550
  %552 = vrot.lane.b32.xlu0 %v534, 112
  %v553 = vpop.permute.xlu0 %552
  %554 = vrot.lane.b32.xlu0 %v537, 112
  %v555 = vpop.permute.xlu0 %554
  %556 = vrot.lane.b32.xlu0 %v539, 112
  %v557 = vpop.permute.xlu0 %556
  %558 = vrot.lane.b32.xlu0 %v541, 112
  %v559 = vpop.permute.xlu0 %558
  %560 = vrot.lane.b32.xlu0 %v544, 112
  %v561 = vpop.permute.xlu0 %560
  %562 = vrot.lane.b32.xlu0 %v547, 112
  %v563 = vpop.permute.xlu0 %562
  %564 = vrot.lane.b32.xlu0 %v549, 112
  %v565 = vpop.permute.xlu0 %564
  %566 = vrot.lane.b32.xlu0 %v551, 112
  %v567 = vpop.permute.xlu0 %566
  %v568 = vsel %vm407, %v553, %v555
  %v569 = vsel %vm407, %v557, %v559
  %v570 = vsel %vm407, %v561, %v563
  %v571 = vsel %vm407, %v565, %v567
  %v576 = vadd.f32 %v496, %v568
  %v577 = vadd.f32 %v497, %v569
  %v578 = vadd.f32 %v498, %v570
  %v579 = vadd.f32 %v499, %v571
  %v580 = vld [vmem:[%s2] sm:$0xff]
  %v581 = vld [vmem:[%s2 + $0x8] sm:$0xff]
  %v582 = vld [vmem:[%s2 + $0x10] sm:$0xff]
  %v583 = vld [vmem:[%s2 + $0x18] sm:$0xff]
  %v584 = vld [vmem:[%s2 + $0x20] sm:$0xff]
  %v585 = vld [vmem:[%s2 + $0x28] sm:$0xff]
  %v586 = vld [vmem:[%s2 + $0x30] sm:$0xff]
  %v587 = vld [vmem:[%s2 + $0x38] sm:$0xff]
  %v588 = vld [vmem:[%s2 + $0x40] sm:$0xff]
  %v589 = vld [vmem:[%s2 + $0x48] sm:$0xff]
  %v590 = vld [vmem:[%s2 + $0x50] sm:$0xff]
  %v591 = vld [vmem:[%s2 + $0x58] sm:$0xff]
  %v592 = vld [vmem:[%s2 + $0x60] sm:$0xff]
  %v593 = vld [vmem:[%s2 + $0x68] sm:$0xff]
  %v594 = vld [vmem:[%s2 + $0x70] sm:$0xff]
  %v595 = vld [vmem:[%s2 + $0x78] sm:$0xff]
  %v596 = vld [vmem:[%s2 + $0x80] sm:$0xff]
  %v597 = vld [vmem:[%s2 + $0x88] sm:$0xff]
  %v598 = vld [vmem:[%s2 + $0x90] sm:$0xff]
  %v599 = vld [vmem:[%s2 + $0x98] sm:$0xff]
  %v600 = vld [vmem:[%s2 + $0xa0] sm:$0xff]
  %v601 = vld [vmem:[%s2 + $0xa8] sm:$0xff]
  %v602 = vld [vmem:[%s2 + $0xb0] sm:$0xff]
  %v603 = vld [vmem:[%s2 + $0xb8] sm:$0xff]
  %v604 = vld [vmem:[%s2 + $0xc0] sm:$0xff]
  %v605 = vld [vmem:[%s2 + $0xc8] sm:$0xff]
  %v606 = vld [vmem:[%s2 + $0xd0] sm:$0xff]
  %v607 = vld [vmem:[%s2 + $0xd8] sm:$0xff]
  %v608 = vld [vmem:[%s2 + $0xe0] sm:$0xff]
  %v609 = vld [vmem:[%s2 + $0xe8] sm:$0xff]
  %v610 = vld [vmem:[%s2 + $0xf0] sm:$0xff]
  %v611 = vld [vmem:[%s2 + $0xf8] sm:$0xff]
  %612 = vmatprep.subr.mxu0 %v581
  %613 = vmatpush1.msra.mxu0 %v580
  %614 = vmatprep.subr.mxu0 %v583
  %615 = vmatpush1.msra.mxu0 %v582
  %616 = vmatprep.subr.mxu0 %v585
  %617 = vmatpush1.msra.mxu0 %v584
  %618 = vmatprep.subr.mxu0 %v587
  %619 = vmatpush1.msra.mxu0 %v586
  %620 = vmatprep.subr.mxu0 %v589
  %621 = vmatpush1.msra.mxu0 %v588
  %622 = vmatprep.subr.mxu0 %v591
  %623 = vmatpush1.msra.mxu0 %v590
  %624 = vmatprep.subr.mxu0 %v593
  %625 = vmatpush1.msra.mxu0 %v592
  %626 = vmatprep.subr.mxu0 %v595
  %627 = vmatpush1.msra.mxu0 %v594
  %628 = vmatprep.subr.mxu0 %v597
  %629 = vmatpush1.msra.mxu0 %v596
  %630 = vmatprep.subr.mxu0 %v599
  %631 = vmatpush1.msra.mxu0 %v598
  %632 = vmatprep.subr.mxu0 %v601
  %633 = vmatpush1.msra.mxu0 %v600
  %634 = vmatprep.subr.mxu0 %v603
  %635 = vmatpush1.msra.mxu0 %v602
  %636 = vmatprep.subr.mxu0 %v605
  %637 = vmatpush1.msra.mxu0 %v604
  %638 = vmatprep.subr.mxu0 %v607
  %639 = vmatpush1.msra.mxu0 %v606
  %640 = vmatprep.subr.mxu0 %v609
  %641 = vmatpush1.msra.mxu0 %v608
  %642 = vmatprep.subr.mxu0 %v611
  %643 = vmatpush1.msra.mxu0 %v610
  %644 = vmatprep.subr.mxu0 0.0
  %645 = vmatpush1.msra.mxu0 0.0
  %646 = vmatprep.subr.mxu0 0.0
  %647 = vmatpush1.msra.mxu0 0.0
  %648 = vmatprep.subr.mxu0 0.0
  %649 = vmatpush1.msra.mxu0 0.0
  %650 = vmatprep.subr.mxu0 0.0
  %651 = vmatpush1.msra.mxu0 0.0
  %652 = vmatprep.subr.mxu0 0.0
  %653 = vmatpush1.msra.mxu0 0.0
  %654 = vmatprep.subr.mxu0 0.0
  %655 = vmatpush1.msra.mxu0 0.0
  %656 = vmatprep.subr.mxu0 0.0
  %657 = vmatpush1.msra.mxu0 0.0
  %658 = vmatprep.subr.mxu0 0.0
  %659 = vmatpush1.msra.mxu0 0.0
  %660 = vmatprep.subr.mxu0 0.0
  %661 = vmatpush1.msra.mxu0 0.0
  %662 = vmatprep.subr.mxu0 0.0
  %663 = vmatpush1.msra.mxu0 0.0
  %664 = vmatprep.subr.mxu0 0.0
  %665 = vmatpush1.msra.mxu0 0.0
  %666 = vmatprep.subr.mxu0 0.0
  %667 = vmatpush1.msra.mxu0 0.0
  %668 = vmatprep.subr.mxu0 0.0
  %669 = vmatpush1.msra.mxu0 0.0
  %670 = vmatprep.subr.mxu0 0.0
  %671 = vmatpush1.msra.mxu0 0.0
  %672 = vmatprep.subr.mxu0 0.0
  %673 = vmatpush1.msra.mxu0 0.0
  %674 = vmatprep.subr.mxu0 0.0
  %675 = vmatpush1.msra.mxu0 0.0
  %676 = vmatprep.mubr.f32.mxu0 0.0
  %677 = vmatmul.mubr.f32.gmra.mrb[0].mxu0 %v576
  %v678 = vpop.f32.mrb[0].mxu0
  %v679 = vadd.f32 0.0, %v678
  %v680 = vpop.f32.mrb[0].mxu0
  %v681 = vadd.f32 0.0, %v680
  %682 = vmatprep.mubr.f32.mxu0 0.0
  %683 = vmatmul.mubr.f32.gmra.mrb[0].mxu0 %v577
  %v684 = vpop.f32.mrb[0].mxu0
  %v685 = vadd.f32 0.0, %v684
  %v686 = vpop.f32.mrb[0].mxu0
  %v687 = vadd.f32 0.0, %v686
  %688 = vmatprep.mubr.f32.mxu0 0.0
  %689 = vmatmul.mubr.f32.gmra.mrb[0].mxu0 %v578
  %v690 = vpop.f32.mrb[0].mxu0
  %v691 = vadd.f32 0.0, %v690
  %v692 = vpop.f32.mrb[0].mxu0
  %v693 = vadd.f32 0.0, %v692
  %694 = vmatprep.mubr.f32.mxu0 0.0
  %695 = vmatmul.mubr.f32.gmra.mrb[0].mxu0 %v579
  %v696 = vpop.f32.mrb[0].mxu0
  %v697 = vadd.f32 0.0, %v696
  %v698 = vpop.f32.mrb[0].mxu0
  %v699 = vadd.f32 0.0, %v698
  %700 = vdwg.mxu0
  %v701 = vadd.f32 %v679, %v685
  %v702 = vadd.f32 %v701, %v691
  %v703 = vadd.f32 %v702, %v697
  %v704 = vrot.slane %v703, 4
  %v705 = vadd.f32 %v703, %v704
  %v706 = vrot.slane %v705, 2
  %v707 = vadd.f32 %v705, %v706
  %v708 = vrot.slane %v707, 1
  %v709 = vadd.f32 %v707, %v708
  %vm710 = vcmask 130048
  %v711 = vsel %vm710, %v681, 0.0
  %v712 = vsel %vm710, %v687, 0.0
  %v713 = vadd.f32 %v711, %v712
  %v714 = vsel %vm710, %v693, 0.0
  %v715 = vadd.f32 %v713, %v714
  %v716 = vsel %vm710, %v699, 0.0
  %v717 = vadd.f32 %v715, %v716
  %v718 = vrot.slane %v717, 4
  %v719 = vadd.f32 %v717, %v718
  %v720 = vrot.slane %v719, 2
  %v721 = vadd.f32 %v719, %v720
  %v722 = vrot.slane %v721, 1
  %v723 = vadd.f32 %v721, %v722
  %v724 = vmul.f32 %v679, %v679
  %v725 = vmul.f32 %v681, %v681
  %v726 = vmul.f32 %v685, %v685
  %v727 = vmul.f32 %v687, %v687
  %v728 = vmul.f32 %v691, %v691
  %v729 = vmul.f32 %v693, %v693
  %v730 = vmul.f32 %v697, %v697
  %v731 = vmul.f32 %v699, %v699
  %v732 = vadd.f32 %v724, %v726
  %v733 = vadd.f32 %v732, %v728
  %v734 = vadd.f32 %v733, %v730
  %v735 = vrot.slane %v734, 4
  %v736 = vadd.f32 %v734, %v735
  %v737 = vrot.slane %v736, 2
  %v738 = vadd.f32 %v736, %v737
  %v739 = vrot.slane %v738, 1
  %v740 = vadd.f32 %v738, %v739
  %v741 = vsel %vm710, %v725, 0.0
  %v742 = vsel %vm710, %v727, 0.0
  %v743 = vadd.f32 %v741, %v742
  %v744 = vsel %vm710, %v729, 0.0
  %v745 = vadd.f32 %v743, %v744
  %v746 = vsel %vm710, %v731, 0.0
  %v747 = vadd.f32 %v745, %v746
  %v748 = vrot.slane %v747, 4
  %v749 = vadd.f32 %v747, %v748
  %v750 = vrot.slane %v749, 2
  %v751 = vadd.f32 %v749, %v750
  %v752 = vrot.slane %v751, 1
  %v753 = vadd.f32 %v751, %v752
  %v754 = vld [vmem:[%s3] sm:$0xff]
  %v755 = vld [vmem:[%s3 + $0x8] sm:$0xff]
  %v756 = vld [vmem:[%s3 + $0x10] sm:$0xff]
  %v757 = vld [vmem:[%s3 + $0x18] sm:$0xff]
  %v758 = vld [vmem:[%s3 + $0x20] sm:$0xff]
  %v759 = vld [vmem:[%s3 + $0x28] sm:$0xff]
  %v760 = vld [vmem:[%s3 + $0x30] sm:$0xff]
  %v761 = vld [vmem:[%s3 + $0x38] sm:$0xff]
  %v762 = vld [vmem:[%s3 + $0x40] sm:$0xff]
  %v763 = vld [vmem:[%s3 + $0x48] sm:$0xff]
  %v764 = vld [vmem:[%s3 + $0x50] sm:$0xff]
  %v765 = vld [vmem:[%s3 + $0x58] sm:$0xff]
  %v766 = vld [vmem:[%s3 + $0x60] sm:$0xff]
  %v767 = vld [vmem:[%s3 + $0x68] sm:$0xff]
  %v768 = vld [vmem:[%s3 + $0x70] sm:$0xff]
  %v769 = vld [vmem:[%s3 + $0x78] sm:$0xff]
  %v770 = vld [vmem:[%s3 + $0x80] sm:$0xff]
  %v771 = vld [vmem:[%s3 + $0x88] sm:$0xff]
  %v773 = vsel %vm710, %v723, 0
  %775 = vmatprep.subr.mxu0 0.0
  %776 = vmatpush1.msra.mxu0 %v754
  %777 = vmatprep.subr.mxu0 0.0
  %778 = vmatpush1.msra.mxu0 %v755
  %779 = vmatprep.subr.mxu0 0.0
  %780 = vmatpush1.msra.mxu0 %v756
  %781 = vmatprep.subr.mxu0 0.0
  %782 = vmatpush1.msra.mxu0 %v757
  %783 = vmatprep.subr.mxu0 0.0
  %784 = vmatpush1.msra.mxu0 %v758
  %785 = vmatprep.subr.mxu0 0.0
  %786 = vmatpush1.msra.mxu0 %v759
  %787 = vmatprep.subr.mxu0 0.0
  %788 = vmatpush1.msra.mxu0 %v760
  %789 = vmatprep.subr.mxu0 0.0
  %790 = vmatpush1.msra.mxu0 %v761
  %791 = vmatprep.subr.mxu0 0.0
  %792 = vmatpush1.msra.mxu0 %v762
  %793 = vmatprep.subr.mxu0 0.0
  %794 = vmatpush1.msra.mxu0 %v763
  %795 = vmatprep.subr.mxu0 0.0
  %796 = vmatpush1.msra.mxu0 %v764
  %797 = vmatprep.subr.mxu0 0.0
  %798 = vmatpush1.msra.mxu0 %v765
  %799 = vmatprep.subr.mxu0 0.0
  %800 = vmatpush1.msra.mxu0 %v766
  %801 = vmatprep.subr.mxu0 0.0
  %802 = vmatpush1.msra.mxu0 %v767
  %803 = vmatprep.subr.mxu0 0.0
  %804 = vmatpush1.msra.mxu0 %v768
  %805 = vmatprep.subr.mxu0 0.0
  %806 = vmatpush1.msra.mxu0 %v769
  %807 = vmatprep.subr.mxu0 0.0
  %808 = vmatpush1.msra.mxu0 %v770
  %809 = vmatprep.subr.mxu0 0.0
  %810 = vmatpush1.msra.mxu0 %v771
  %811 = vmatprep.subr.mxu0 0.0
  %812 = vmatpush1.msra.mxu0 0.0
  %813 = vmatprep.subr.mxu0 0.0
  %814 = vmatpush1.msra.mxu0 0.0
  %815 = vmatprep.subr.mxu0 0.0
  %816 = vmatpush1.msra.mxu0 0.0
  %817 = vmatprep.subr.mxu0 0.0
  %818 = vmatpush1.msra.mxu0 0.0
  %819 = vmatprep.subr.mxu0 0.0
  %820 = vmatpush1.msra.mxu0 0.0
  %821 = vmatprep.subr.mxu0 0.0
  %822 = vmatpush1.msra.mxu0 0.0
  %823 = vmatprep.subr.mxu0 0.0
  %824 = vmatpush1.msra.mxu0 0.0
  %825 = vmatprep.subr.mxu0 0.0
  %826 = vmatpush1.msra.mxu0 0.0
  %827 = vmatprep.subr.mxu0 0.0
  %828 = vmatpush1.msra.mxu0 0.0
  %829 = vmatprep.subr.mxu0 0.0
  %830 = vmatpush1.msra.mxu0 0.0
  %831 = vmatprep.subr.mxu0 0.0
  %832 = vmatpush1.msra.mxu0 0.0
  %833 = vmatprep.subr.mxu0 0.0
  %834 = vmatpush1.msra.mxu0 0.0
  %835 = vmatprep.subr.mxu0 0.0
  %836 = vmatpush1.msra.mxu0 0.0
  %837 = vmatprep.subr.mxu0 0.0
  %838 = vmatpush1.msra.mxu0 0.0
  %839 = vmatprep.mubr.f32.mxu0 %v773
  %840 = vmatmul.mubr.f32.gmra.mrb[0].mxu0 %v709
  %v841 = vpop.f32.mrb[0].mxu0
  %v842 = vadd.f32 0.0, %v841
  %v843 = vpop.f32.mrb[0].mxu0
  %844 = vdwg.mxu0
  %v846 = vsel %vm710, %v753, 0
  %848 = vmatprep.subr.mxu0 0.0
  %849 = vmatpush1.msra.mxu0 %v754
  %850 = vmatprep.subr.mxu0 0.0
  %851 = vmatpush1.msra.mxu0 %v755
  %852 = vmatprep.subr.mxu0 0.0
  %853 = vmatpush1.msra.mxu0 %v756
  %854 = vmatprep.subr.mxu0 0.0
  %855 = vmatpush1.msra.mxu0 %v757
  %856 = vmatprep.subr.mxu0 0.0
  %857 = vmatpush1.msra.mxu0 %v758
  %858 = vmatprep.subr.mxu0 0.0
  %859 = vmatpush1.msra.mxu0 %v759
  %860 = vmatprep.subr.mxu0 0.0
  %861 = vmatpush1.msra.mxu0 %v760
  %862 = vmatprep.subr.mxu0 0.0
  %863 = vmatpush1.msra.mxu0 %v761
  %864 = vmatprep.subr.mxu0 0.0
  %865 = vmatpush1.msra.mxu0 %v762
  %866 = vmatprep.subr.mxu0 0.0
  %867 = vmatpush1.msra.mxu0 %v763
  %868 = vmatprep.subr.mxu0 0.0
  %869 = vmatpush1.msra.mxu0 %v764
  %870 = vmatprep.subr.mxu0 0.0
  %871 = vmatpush1.msra.mxu0 %v765
  %872 = vmatprep.subr.mxu0 0.0
  %873 = vmatpush1.msra.mxu0 %v766
  %874 = vmatprep.subr.mxu0 0.0
  %875 = vmatpush1.msra.mxu0 %v767
  %876 = vmatprep.subr.mxu0 0.0
  %877 = vmatpush1.msra.mxu0 %v768
  %878 = vmatprep.subr.mxu0 0.0
  %879 = vmatpush1.msra.mxu0 %v769
  %880 = vmatprep.subr.mxu0 0.0
  %881 = vmatpush1.msra.mxu0 %v770
  %882 = vmatprep.subr.mxu0 0.0
  %883 = vmatpush1.msra.mxu0 %v771
  %884 = vmatprep.subr.mxu0 0.0
  %885 = vmatpush1.msra.mxu0 0.0
  %886 = vmatprep.subr.mxu0 0.0
  %887 = vmatpush1.msra.mxu0 0.0
  %888 = vmatprep.subr.mxu0 0.0
  %889 = vmatpush1.msra.mxu0 0.0
  %890 = vmatprep.subr.mxu0 0.0
  %891 = vmatpush1.msra.mxu0 0.0
  %892 = vmatprep.subr.mxu0 0.0
  %893 = vmatpush1.msra.mxu0 0.0
  %894 = vmatprep.subr.mxu0 0.0
  %895 = vmatpush1.msra.mxu0 0.0
  %896 = vmatprep.subr.mxu0 0.0
  %897 = vmatpush1.msra.mxu0 0.0
  %898 = vmatprep.subr.mxu0 0.0
  %899 = vmatpush1.msra.mxu0 0.0
  %900 = vmatprep.subr.mxu0 0.0
  %901 = vmatpush1.msra.mxu0 0.0
  %902 = vmatprep.subr.mxu0 0.0
  %903 = vmatpush1.msra.mxu0 0.0
  %904 = vmatprep.subr.mxu0 0.0
  %905 = vmatpush1.msra.mxu0 0.0
  %906 = vmatprep.subr.mxu0 0.0
  %907 = vmatpush1.msra.mxu0 0.0
  %908 = vmatprep.subr.mxu0 0.0
  %909 = vmatpush1.msra.mxu0 0.0
  %910 = vmatprep.subr.mxu0 0.0
  %911 = vmatpush1.msra.mxu0 0.0
  %912 = vmatprep.mubr.f32.mxu0 %v846
  %913 = vmatmul.mubr.f32.gmra.mrb[0].mxu0 %v740
  %v914 = vpop.f32.mrb[0].mxu0
  %v915 = vadd.f32 0.0, %v914
  %v916 = vpop.f32.mrb[0].mxu0
  %917 = vdwg.mxu0
  %v918 = vrcp.pop 512.0
  %v919 = vmul.f32 %v842, %v918
  %v920 = vmul.f32 %v915, %v918
  %v921 = vmul.f32 %v919, %v919
  %v922 = vsub.f32 %v920, %v921
  %v923 = vmax.f32 %v922, 0.0
  %v924 = vld [vmem:[%s5] sm:$0x1]
  %v925 = vadd.f32 %v923, 1e-05
  %v926 = vrsqrt.pop %v925
  %v927 = vmul.f32 %v924, %v926
  %v928 = vld [vmem:[%s6] sm:$0x1]
  %v929 = vmul.f32 %v919, %v927
  %v930 = vsub.f32 %v928, %v929
  %v931 = vld [vmem:[%s4] sm:$0xff]
  %v932 = vld [vmem:[%s4 + $0x8] sm:$0xff]
  %vm933 = vcmask 64512
  %v935 = vsel %vm933, %v927, 0
  %937 = vmatprep.subr.mxu0 %v932
  %938 = vmatpush1.msra.mxu0 %v931
  %939 = vmatprep.subr.mxu0 0.0
  %940 = vmatpush1.msra.mxu0 0.0
  %941 = vmatprep.subr.mxu0 0.0
  %942 = vmatpush1.msra.mxu0 0.0
  %943 = vmatprep.subr.mxu0 0.0
  %944 = vmatpush1.msra.mxu0 0.0
  %945 = vmatprep.subr.mxu0 0.0
  %946 = vmatpush1.msra.mxu0 0.0
  %947 = vmatprep.subr.mxu0 0.0
  %948 = vmatpush1.msra.mxu0 0.0
  %949 = vmatprep.subr.mxu0 0.0
  %950 = vmatpush1.msra.mxu0 0.0
  %951 = vmatprep.subr.mxu0 0.0
  %952 = vmatpush1.msra.mxu0 0.0
  %953 = vmatprep.subr.mxu0 0.0
  %954 = vmatpush1.msra.mxu0 0.0
  %955 = vmatprep.subr.mxu0 0.0
  %956 = vmatpush1.msra.mxu0 0.0
  %957 = vmatprep.subr.mxu0 0.0
  %958 = vmatpush1.msra.mxu0 0.0
  %959 = vmatprep.subr.mxu0 0.0
  %960 = vmatpush1.msra.mxu0 0.0
  %961 = vmatprep.subr.mxu0 0.0
  %962 = vmatpush1.msra.mxu0 0.0
  %963 = vmatprep.subr.mxu0 0.0
  %964 = vmatpush1.msra.mxu0 0.0
  %965 = vmatprep.subr.mxu0 0.0
  %966 = vmatpush1.msra.mxu0 0.0
  %967 = vmatprep.subr.mxu0 0.0
  %968 = vmatpush1.msra.mxu0 0.0
  %969 = vmatprep.subr.mxu0 0.0
  %970 = vmatpush1.msra.mxu0 0.0
  %971 = vmatprep.subr.mxu0 0.0
  %972 = vmatpush1.msra.mxu0 0.0
  %973 = vmatprep.subr.mxu0 0.0
  %974 = vmatpush1.msra.mxu0 0.0
  %975 = vmatprep.subr.mxu0 0.0
  %976 = vmatpush1.msra.mxu0 0.0
  %977 = vmatprep.subr.mxu0 0.0
  %978 = vmatpush1.msra.mxu0 0.0
  %979 = vmatprep.subr.mxu0 0.0
  %980 = vmatpush1.msra.mxu0 0.0
  %981 = vmatprep.subr.mxu0 0.0
  %982 = vmatpush1.msra.mxu0 0.0
  %983 = vmatprep.subr.mxu0 0.0
  %984 = vmatpush1.msra.mxu0 0.0
  %985 = vmatprep.subr.mxu0 0.0
  %986 = vmatpush1.msra.mxu0 0.0
  %987 = vmatprep.subr.mxu0 0.0
  %988 = vmatpush1.msra.mxu0 0.0
  %989 = vmatprep.subr.mxu0 0.0
  %990 = vmatpush1.msra.mxu0 0.0
  %991 = vmatprep.subr.mxu0 0.0
  %992 = vmatpush1.msra.mxu0 0.0
  %993 = vmatprep.subr.mxu0 0.0
  %994 = vmatpush1.msra.mxu0 0.0
  %995 = vmatprep.subr.mxu0 0.0
  %996 = vmatpush1.msra.mxu0 0.0
  %997 = vmatprep.subr.mxu0 0.0
  %998 = vmatpush1.msra.mxu0 0.0
  %999 = vmatprep.subr.mxu0 0.0
  %1000 = vmatpush1.msra.mxu0 0.0
  %1001 = vmatprep.mubr.f32.mxu0 0.0
  %1002 = vmatmul.mubr.f32.gmra.mrb[0].mxu0 %v935
  %v1003 = vpop.f32.mrb[0].mxu0
  %v1004 = vadd.f32 0.0, %v1003
  %v1005 = vpop.f32.mrb[0].mxu0
  %v1006 = vadd.f32 0.0, %v1005
  %1007 = vdwg.mxu0
  %v1009 = vsel %vm933, %v930, 0
  %1011 = vmatprep.subr.mxu0 %v932
  %1012 = vmatpush1.msra.mxu0 %v931
  %1013 = vmatprep.subr.mxu0 0.0
  %1014 = vmatpush1.msra.mxu0 0.0
  %1015 = vmatprep.subr.mxu0 0.0
  %1016 = vmatpush1.msra.mxu0 0.0
  %1017 = vmatprep.subr.mxu0 0.0
  %1018 = vmatpush1.msra.mxu0 0.0
  %1019 = vmatprep.subr.mxu0 0.0
  %1020 = vmatpush1.msra.mxu0 0.0
  %1021 = vmatprep.subr.mxu0 0.0
  %1022 = vmatpush1.msra.mxu0 0.0
  %1023 = vmatprep.subr.mxu0 0.0
  %1024 = vmatpush1.msra.mxu0 0.0
  %1025 = vmatprep.subr.mxu0 0.0
  %1026 = vmatpush1.msra.mxu0 0.0
  %1027 = vmatprep.subr.mxu0 0.0
  %1028 = vmatpush1.msra.mxu0 0.0
  %1029 = vmatprep.subr.mxu0 0.0
  %1030 = vmatpush1.msra.mxu0 0.0
  %1031 = vmatprep.subr.mxu0 0.0
  %1032 = vmatpush1.msra.mxu0 0.0
  %1033 = vmatprep.subr.mxu0 0.0
  %1034 = vmatpush1.msra.mxu0 0.0
  %1035 = vmatprep.subr.mxu0 0.0
  %1036 = vmatpush1.msra.mxu0 0.0
  %1037 = vmatprep.subr.mxu0 0.0
  %1038 = vmatpush1.msra.mxu0 0.0
  %1039 = vmatprep.subr.mxu0 0.0
  %1040 = vmatpush1.msra.mxu0 0.0
  %1041 = vmatprep.subr.mxu0 0.0
  %1042 = vmatpush1.msra.mxu0 0.0
  %1043 = vmatprep.subr.mxu0 0.0
  %1044 = vmatpush1.msra.mxu0 0.0
  %1045 = vmatprep.subr.mxu0 0.0
  %1046 = vmatpush1.msra.mxu0 0.0
  %1047 = vmatprep.subr.mxu0 0.0
  %1048 = vmatpush1.msra.mxu0 0.0
  %1049 = vmatprep.subr.mxu0 0.0
  %1050 = vmatpush1.msra.mxu0 0.0
  %1051 = vmatprep.subr.mxu0 0.0
  %1052 = vmatpush1.msra.mxu0 0.0
  %1053 = vmatprep.subr.mxu0 0.0
  %1054 = vmatpush1.msra.mxu0 0.0
  %1055 = vmatprep.subr.mxu0 0.0
  %1056 = vmatpush1.msra.mxu0 0.0
  %1057 = vmatprep.subr.mxu0 0.0
  %1058 = vmatpush1.msra.mxu0 0.0
  %1059 = vmatprep.subr.mxu0 0.0
  %1060 = vmatpush1.msra.mxu0 0.0
  %1061 = vmatprep.subr.mxu0 0.0
  %1062 = vmatpush1.msra.mxu0 0.0
  %1063 = vmatprep.subr.mxu0 0.0
  %1064 = vmatpush1.msra.mxu0 0.0
  %1065 = vmatprep.subr.mxu0 0.0
  %1066 = vmatpush1.msra.mxu0 0.0
  %1067 = vmatprep.subr.mxu0 0.0
  %1068 = vmatpush1.msra.mxu0 0.0
  %1069 = vmatprep.subr.mxu0 0.0
  %1070 = vmatpush1.msra.mxu0 0.0
  %1071 = vmatprep.subr.mxu0 0.0
  %1072 = vmatpush1.msra.mxu0 0.0
  %1073 = vmatprep.subr.mxu0 0.0
  %1074 = vmatpush1.msra.mxu0 0.0
  %1075 = vmatprep.mubr.f32.mxu0 0.0
  %1076 = vmatmul.mubr.f32.gmra.mrb[0].mxu0 %v1009
  %v1077 = vpop.f32.mrb[0].mxu0
  %v1078 = vadd.f32 0.0, %v1077
  %v1079 = vpop.f32.mrb[0].mxu0
  %v1080 = vadd.f32 0.0, %v1079
  %1081 = vdwg.mxu0
  %v1082 = vlaneseq
  %v1083 = vshrl.u32 %v1082, 7
  %v1084 = vsub.s32 0, %v1083
  %v1085 = vrot.slane %v1004, %v1084
  %v1086 = vlaneseq
  %v1087 = vshrl.u32 %v1086, 7
  %v1088 = vsub.s32 0, %v1087
  %v1089 = vrot.slane %v1006, %v1088
  %v1090 = vmul.f32 %v679, %v1085
  %v1091 = vmul.f32 %v681, %v1089
  %v1092 = vmul.f32 %v685, %v1085
  %v1093 = vmul.f32 %v687, %v1089
  %v1094 = vmul.f32 %v691, %v1085
  %v1095 = vmul.f32 %v693, %v1089
  %v1096 = vmul.f32 %v697, %v1085
  %v1097 = vmul.f32 %v699, %v1089
  %v1098 = vlaneseq
  %v1099 = vshrl.u32 %v1098, 7
  %v1100 = vsub.s32 0, %v1099
  %v1101 = vrot.slane %v1078, %v1100
  %v1102 = vlaneseq
  %v1103 = vshrl.u32 %v1102, 7
  %v1104 = vsub.s32 0, %v1103
  %v1105 = vrot.slane %v1080, %v1104
  %v1106 = vadd.f32 %v1090, %v1101
  %v1107 = vadd.f32 %v1091, %v1105
  %v1108 = vadd.f32 %v1092, %v1101
  %v1109 = vadd.f32 %v1093, %v1105
  %v1110 = vadd.f32 %v1094, %v1101
  %v1111 = vadd.f32 %v1095, %v1105
  %v1112 = vadd.f32 %v1096, %v1101
  %v1113 = vadd.f32 %v1097, %v1105
  %v1114 = vmax.f32 %v1106, 0.0
  %v1115 = vmax.f32 %v1107, 0.0
  %v1116 = vmax.f32 %v1108, 0.0
  %v1117 = vmax.f32 %v1109, 0.0
  %v1118 = vmax.f32 %v1110, 0.0
  %v1119 = vmax.f32 %v1111, 0.0
  %v1120 = vmax.f32 %v1112, 0.0
  %v1121 = vmax.f32 %v1113, 0.0
  %v1122 = vlaneseq
  %vm1123 = vcmp.ge.s32.totalorder %v1122, 0
  %vm1124 = vcmp.lt.s32.totalorder %v1122, 144
  %vm1125 = vmand %vm1123, %vm1124
  %1126 = vst.msk [vmem:[#allocation2] ss:$8 sm:$0x3] %vm1125, 0.0
  %1127 = vst.msk [vmem:[#allocation2] ss:$8 sm:$0x0] %vm1125, 0.0
  %s1128 = scalar_lea.vmem [#allocation2], 48
  %1129 = vst.msk [vmem:[%s1128] ss:$8 sm:$0x3] %vm1125, 0.0
  %1130 = vst.msk [vmem:[%s1128] ss:$8 sm:$0x0] %vm1125, 0.0
  %s1131 = scalar_lea.vmem [#allocation2], 33
  %1132 = vst.msk [vmem:[%s1131] ss:$8 sm:$0x3] %vm1125, 0.0
  %1133 = vst.msk [vmem:[%s1131] ss:$8 sm:$0x0] %vm1125, 0.0
  %s1134 = scalar_lea.vmem [#allocation2], 81
  %1135 = vst.msk [vmem:[%s1134] ss:$8 sm:$0x3] %vm1125, 0.0
  %1136 = vst.msk [vmem:[%s1134] ss:$8 sm:$0x0] %vm1125, 0.0
  %vm1145 = vcmask 1040384
  %v1146 = vrot.slane %v1114, 7
  %v1147 = vrot.slane %v1115, 7
  %v1148 = vrot.slane %v1116, 7
  %v1149 = vsel %vm1145, %v1146, %v1148
  %v1150 = vrot.slane %v1117, 7
  %v1151 = vsel %vm1145, %v1147, %v1150
  %v1152 = vrot.slane %v1118, 7
  %v1153 = vrot.slane %v1119, 7
  %v1154 = vrot.slane %v1120, 7
  %v1155 = vsel %vm1145, %v1152, %v1154
  %v1156 = vrot.slane %v1121, 7
  %v1157 = vsel %vm1145, %v1153, %v1156
  %1170 = vst [vmem:[#allocation2] sm:$0xfe] %v1146
  %vm1171 = vcmask 130049
  %1172 = vst.msk [vmem:[#allocation2 + $0x8] sm:$0xfe] %vm1171, %v1147
  %1173 = vst [vmem:[#allocation2 + $0x10] sm:$0xff] %v1149
  %1174 = vst.msk [vmem:[#allocation2 + $0x18] sm:$0xff] %vm710, %v1151
  %1175 = vst [vmem:[#allocation2 + $0x20] sm:$0x1] %v1148
  %vm1176 = vcmask 122880
  %1177 = vst.msk [vmem:[#allocation2 + $0x28] sm:$0x1] %vm1176, %v1150
  %1178 = vst [vmem:[#allocation2 + $0x30] sm:$0xfe] %v1152
  %1179 = vst.msk [vmem:[#allocation2 + $0x38] sm:$0xfe] %vm1171, %v1153
  %1180 = vst [vmem:[#allocation2 + $0x40] sm:$0xff] %v1155
  %1181 = vst.msk [vmem:[#allocation2 + $0x48] sm:$0xff] %vm710, %v1157
  %1182 = vst [vmem:[#allocation2 + $0x50] sm:$0x1] %v1154
  %1183 = vst.msk [vmem:[#allocation2 + $0x58] sm:$0x1] %vm1176, %v1156
  %v1184 = vld [vmem:[#allocation2] sm:$0xff]
  %v1185 = vld [vmem:[#allocation2 + $0x8] sm:$0xff]
  %v1186 = vld [vmem:[#allocation2 + $0x10] sm:$0xff]
  %v1187 = vld [vmem:[#allocation2 + $0x18] sm:$0xff]
  %v1188 = vld [vmem:[#allocation2 + $0x20] sm:$0x3]
  %v1189 = vld [vmem:[#allocation2 + $0x28] sm:$0x3]
  %v1190 = vld [vmem:[#allocation2 + $0x30] sm:$0xff]
  %v1191 = vld [vmem:[#allocation2 + $0x38] sm:$0xff]
  %v1192 = vld [vmem:[#allocation2 + $0x40] sm:$0xff]
  %v1193 = vld [vmem:[#allocation2 + $0x48] sm:$0xff]
  %v1194 = vld [vmem:[#allocation2 + $0x50] sm:$0x3]
  %v1195 = vld [vmem:[#allocation2 + $0x58] sm:$0x3]
  %v1196 = vlaneseq
  %v1197 = vshrl.u32 %v1196, 7
  %v1198 = vsub.s32 0, %v1197
  %v1199 = vrot.slane %v46, %v1198
  %v1200 = vmul.f32 %v1184, %v1199
  %v1201 = vmul.f32 %v1186, %v1199
  %v1202 = vmul.f32 %v1190, %v1199
  %v1203 = vmul.f32 %v1192, %v1199
  %v1204 = vadd.f32 %v1200, 0.0
  %v1205 = vadd.f32 %v1201, 0.0
  %v1206 = vadd.f32 %v1202, 0.0
  %v1207 = vadd.f32 %v1203, 0.0
  %v1208 = vlaneseq
  %v1209 = vshrl.u32 %v1208, 7
  %v1210 = vsub.s32 3, %v1209
  %v1211 = vrot.slane %v46, %v1210
  %v1212 = vmul.f32 %v1184, %v1211
  %v1213 = vmul.f32 %v1186, %v1211
  %v1214 = vmul.f32 %v1188, %v1211
  %v1215 = vmul.f32 %v1190, %v1211
  %v1216 = vmul.f32 %v1192, %v1211
  %v1217 = vmul.f32 %v1194, %v1211
  %v1224 = vrot.slane %v1212, 1
  %v1225 = vrot.slane %v1213, 1
  %v1226 = vsel %vm100, %v1224, %v1225
  %v1227 = vrot.slane %v1214, 1
  %v1228 = vsel %vm100, %v1225, %v1227
  %v1229 = vrot.slane %v1215, 1
  %v1230 = vrot.slane %v1216, 1
  %v1231 = vsel %vm100, %v1229, %v1230
  %v1232 = vrot.slane %v1217, 1
  %v1233 = vsel %vm100, %v1230, %v1232
  %v1238 = vadd.f32 %v1204, %v1226
  %v1239 = vadd.f32 %v1205, %v1228
  %v1240 = vadd.f32 %v1206, %v1231
  %v1241 = vadd.f32 %v1207, %v1233
  %v1242 = vlaneseq
  %v1243 = vshrl.u32 %v1242, 7
  %v1244 = vsub.s32 6, %v1243
  %v1245 = vrot.slane %v46, %v1244
  %v1246 = vmul.f32 %v1184, %v1245
  %v1247 = vmul.f32 %v1186, %v1245
  %v1248 = vmul.f32 %v1188, %v1245
  %v1249 = vmul.f32 %v1190, %v1245
  %v1250 = vmul.f32 %v1192, %v1245
  %v1251 = vmul.f32 %v1194, %v1245
  %v1258 = vrot.slane %v1246, 2
  %v1259 = vrot.slane %v1247, 2
  %v1260 = vsel %vm135, %v1258, %v1259
  %v1261 = vrot.slane %v1248, 2
  %v1262 = vsel %vm135, %v1259, %v1261
  %v1263 = vrot.slane %v1249, 2
  %v1264 = vrot.slane %v1250, 2
  %v1265 = vsel %vm135, %v1263, %v1264
  %v1266 = vrot.slane %v1251, 2
  %v1267 = vsel %vm135, %v1264, %v1266
  %v1272 = vadd.f32 %v1238, %v1260
  %v1273 = vadd.f32 %v1239, %v1262
  %v1274 = vadd.f32 %v1240, %v1265
  %v1275 = vadd.f32 %v1241, %v1267
  %v1276 = vlaneseq
  %v1277 = vshrl.u32 %v1276, 7
  %v1278 = vsub.s32 1, %v1277
  %v1279 = vrot.slane %v46, %v1278
  %1281 = vrot.lane.b32.xlu0 %v1279, 8
  %v1282 = vpop.permute.xlu0 %1281
  %v1284 = vmul.f32 %v1184, %v1282
  %v1285 = vmul.f32 %v1185, %v1282
  %v1286 = vmul.f32 %v1186, %v1282
  %v1287 = vmul.f32 %v1187, %v1282
  %v1288 = vmul.f32 %v1190, %v1282
  %v1289 = vmul.f32 %v1191, %v1282
  %v1290 = vmul.f32 %v1192, %v1282
  %v1291 = vmul.f32 %v1193, %v1282
  %1300 = vrot.lane.b32.xlu0 %v1284, 120
  %v1301 = vpop.permute.xlu0 %1300
  %1302 = vrot.lane.b32.xlu0 %v1285, 120
  %v1303 = vpop.permute.xlu0 %1302
  %1304 = vrot.lane.b32.xlu0 %v1286, 120
  %v1305 = vpop.permute.xlu0 %1304
  %1306 = vrot.lane.b32.xlu0 %v1287, 120
  %v1307 = vpop.permute.xlu0 %1306
  %1308 = vrot.lane.b32.xlu0 %v1288, 120
  %v1309 = vpop.permute.xlu0 %1308
  %1310 = vrot.lane.b32.xlu0 %v1289, 120
  %v1311 = vpop.permute.xlu0 %1310
  %1312 = vrot.lane.b32.xlu0 %v1290, 120
  %v1313 = vpop.permute.xlu0 %1312
  %1314 = vrot.lane.b32.xlu0 %v1291, 120
  %v1315 = vpop.permute.xlu0 %1314
  %v1316 = vsel %vm194, %v1301, %v1303
  %v1317 = vsel %vm194, %v1305, %v1307
  %v1318 = vsel %vm194, %v1309, %v1311
  %v1319 = vsel %vm194, %v1313, %v1315
  %v1324 = vadd.f32 %v1272, %v1316
  %v1325 = vadd.f32 %v1273, %v1317
  %v1326 = vadd.f32 %v1274, %v1318
  %v1327 = vadd.f32 %v1275, %v1319
  %v1328 = vlaneseq
  %v1329 = vshrl.u32 %v1328, 7
  %v1330 = vsub.s32 4, %v1329
  %v1331 = vrot.slane %v46, %v1330
  %1333 = vrot.lane.b32.xlu0 %v1331, 8
  %v1334 = vpop.permute.xlu0 %1333
  %v1336 = vmul.f32 %v1184, %v1334
  %v1337 = vmul.f32 %v1185, %v1334
  %v1338 = vmul.f32 %v1186, %v1334
  %v1339 = vmul.f32 %v1187, %v1334
  %v1340 = vmul.f32 %v1188, %v1334
  %v1341 = vmul.f32 %v1189, %v1334
  %v1342 = vmul.f32 %v1190, %v1334
  %v1343 = vmul.f32 %v1191, %v1334
  %v1344 = vmul.f32 %v1192, %v1334
  %v1345 = vmul.f32 %v1193, %v1334
  %v1346 = vmul.f32 %v1194, %v1334
  %v1347 = vmul.f32 %v1195, %v1334
  %v1360 = vrot.slane %v1336, 1
  %v1361 = vrot.slane %v1338, 1
  %v1362 = vsel %vm100, %v1360, %v1361
  %v1363 = vrot.slane %v1337, 1
  %v1364 = vrot.slane %v1339, 1
  %v1365 = vsel %vm100, %v1363, %v1364
  %v1366 = vrot.slane %v1340, 1
  %v1367 = vsel %vm100, %v1361, %v1366
  %v1368 = vrot.slane %v1341, 1
  %v1369 = vsel %vm100, %v1364, %v1368
  %v1370 = vrot.slane %v1342, 1
  %v1371 = vrot.slane %v1344, 1
  %v1372 = vsel %vm100, %v1370, %v1371
  %v1373 = vrot.slane %v1343, 1
  %v1374 = vrot.slane %v1345, 1
  %v1375 = vsel %vm100, %v1373, %v1374
  %v1376 = vrot.slane %v1346, 1
  %v1377 = vsel %vm100, %v1371, %v1376
  %v1378 = vrot.slane %v1347, 1
  %v1379 = vsel %vm100, %v1374, %v1378
  %1380 = vrot.lane.b32.xlu0 %v1362, 120
  %v1381 = vpop.permute.xlu0 %1380
  %1382 = vrot.lane.b32.xlu0 %v1365, 120
  %v1383 = vpop.permute.xlu0 %1382
  %1384 = vrot.lane.b32.xlu0 %v1367, 120
  %v1385 = vpop.permute.xlu0 %1384
  %1386 = vrot.lane.b32.xlu0 %v1369, 120
  %v1387 = vpop.permute.xlu0 %1386
  %1388 = vrot.lane.b32.xlu0 %v1372, 120
  %v1389 = vpop.permute.xlu0 %1388
  %1390 = vrot.lane.b32.xlu0 %v1375, 120
  %v1391 = vpop.permute.xlu0 %1390
  %1392 = vrot.lane.b32.xlu0 %v1377, 120
  %v1393 = vpop.permute.xlu0 %1392
  %1394 = vrot.lane.b32.xlu0 %v1379, 120
  %v1395 = vpop.permute.xlu0 %1394
  %v1396 = vsel %vm194, %v1381, %v1383
  %v1397 = vsel %vm194, %v1385, %v1387
  %v1398 = vsel %vm194, %v1389, %v1391
  %v1399 = vsel %vm194, %v1393, %v1395
  %v1404 = vadd.f32 %v1324, %v1396
  %v1405 = vadd.f32 %v1325, %v1397
  %v1406 = vadd.f32 %v1326, %v1398
  %v1407 = vadd.f32 %v1327, %v1399
  %v1408 = vlaneseq
  %v1409 = vshrl.u32 %v1408, 7
  %v1410 = vsub.s32 7, %v1409
  %v1411 = vrot.slane %v46, %v1410
  %1413 = vrot.lane.b32.xlu0 %v1411, 8
  %v1414 = vpop.permute.xlu0 %1413
  %v1416 = vmul.f32 %v1184, %v1414
  %v1417 = vmul.f32 %v1185, %v1414
  %v1418 = vmul.f32 %v1186, %v1414
  %v1419 = vmul.f32 %v1187, %v1414
  %v1420 = vmul.f32 %v1188, %v1414
  %v1421 = vmul.f32 %v1189, %v1414
  %v1422 = vmul.f32 %v1190, %v1414
  %v1423 = vmul.f32 %v1191, %v1414
  %v1424 = vmul.f32 %v1192, %v1414
  %v1425 = vmul.f32 %v1193, %v1414
  %v1426 = vmul.f32 %v1194, %v1414
  %v1427 = vmul.f32 %v1195, %v1414
  %v1440 = vrot.slane %v1416, 2
  %v1441 = vrot.slane %v1418, 2
  %v1442 = vsel %vm135, %v1440, %v1441
  %v1443 = vrot.slane %v1417, 2
  %v1444 = vrot.slane %v1419, 2
  %v1445 = vsel %vm135, %v1443, %v1444
  %v1446 = vrot.slane %v1420, 2
  %v1447 = vsel %vm135, %v1441, %v1446
  %v1448 = vrot.slane %v1421, 2
  %v1449 = vsel %vm135, %v1444, %v1448
  %v1450 = vrot.slane %v1422, 2
  %v1451 = vrot.slane %v1424, 2
  %v1452 = vsel %vm135, %v1450, %v1451
  %v1453 = vrot.slane %v1423, 2
  %v1454 = vrot.slane %v1425, 2
  %v1455 = vsel %vm135, %v1453, %v1454
  %v1456 = vrot.slane %v1426, 2
  %v1457 = vsel %vm135, %v1451, %v1456
  %v1458 = vrot.slane %v1427, 2
  %v1459 = vsel %vm135, %v1454, %v1458
  %1460 = vrot.lane.b32.xlu0 %v1442, 120
  %v1461 = vpop.permute.xlu0 %1460
  %1462 = vrot.lane.b32.xlu0 %v1445, 120
  %v1463 = vpop.permute.xlu0 %1462
  %1464 = vrot.lane.b32.xlu0 %v1447, 120
  %v1465 = vpop.permute.xlu0 %1464
  %1466 = vrot.lane.b32.xlu0 %v1449, 120
  %v1467 = vpop.permute.xlu0 %1466
  %1468 = vrot.lane.b32.xlu0 %v1452, 120
  %v1469 = vpop.permute.xlu0 %1468
  %1470 = vrot.lane.b32.xlu0 %v1455, 120
  %v1471 = vpop.permute.xlu0 %1470
  %1472 = vrot.lane.b32.xlu0 %v1457, 120
  %v1473 = vpop.permute.xlu0 %1472
  %1474 = vrot.lane.b32.xlu0 %v1459, 120
  %v1475 = vpop.permute.xlu0 %1474
  %v1476 = vsel %vm194, %v1461, %v1463
  %v1477 = vsel %vm194, %v1465, %v1467
  %v1478 = vsel %vm194, %v1469, %v1471
  %v1479 = vsel %vm194, %v1473, %v1475
  %v1484 = vadd.f32 %v1404, %v1476
  %v1485 = vadd.f32 %v1405, %v1477
  %v1486 = vadd.f32 %v1406, %v1478
  %v1487 = vadd.f32 %v1407, %v1479
  %v1488 = vlaneseq
  %v1489 = vshrl.u32 %v1488, 7
  %v1490 = vsub.s32 2, %v1489
  %v1491 = vrot.slane %v46, %v1490
  %1493 = vrot.lane.b32.xlu0 %v1491, 16
  %v1494 = vpop.permute.xlu0 %1493
  %v1496 = vmul.f32 %v1184, %v1494
  %v1497 = vmul.f32 %v1185, %v1494
  %v1498 = vmul.f32 %v1186, %v1494
  %v1499 = vmul.f32 %v1187, %v1494
  %v1500 = vmul.f32 %v1190, %v1494
  %v1501 = vmul.f32 %v1191, %v1494
  %v1502 = vmul.f32 %v1192, %v1494
  %v1503 = vmul.f32 %v1193, %v1494
  %1512 = vrot.lane.b32.xlu0 %v1496, 112
  %v1513 = vpop.permute.xlu0 %1512
  %1514 = vrot.lane.b32.xlu0 %v1497, 112
  %v1515 = vpop.permute.xlu0 %1514
  %1516 = vrot.lane.b32.xlu0 %v1498, 112
  %v1517 = vpop.permute.xlu0 %1516
  %1518 = vrot.lane.b32.xlu0 %v1499, 112
  %v1519 = vpop.permute.xlu0 %1518
  %1520 = vrot.lane.b32.xlu0 %v1500, 112
  %v1521 = vpop.permute.xlu0 %1520
  %1522 = vrot.lane.b32.xlu0 %v1501, 112
  %v1523 = vpop.permute.xlu0 %1522
  %1524 = vrot.lane.b32.xlu0 %v1502, 112
  %v1525 = vpop.permute.xlu0 %1524
  %1526 = vrot.lane.b32.xlu0 %v1503, 112
  %v1527 = vpop.permute.xlu0 %1526
  %v1528 = vsel %vm407, %v1513, %v1515
  %v1529 = vsel %vm407, %v1517, %v1519
  %v1530 = vsel %vm407, %v1521, %v1523
  %v1531 = vsel %vm407, %v1525, %v1527
  %v1536 = vadd.f32 %v1484, %v1528
  %v1537 = vadd.f32 %v1485, %v1529
  %v1538 = vadd.f32 %v1486, %v1530
  %v1539 = vadd.f32 %v1487, %v1531
  %v1540 = vlaneseq
  %v1541 = vshrl.u32 %v1540, 7
  %v1542 = vsub.s32 5, %v1541
  %v1543 = vrot.slane %v46, %v1542
  %1545 = vrot.lane.b32.xlu0 %v1543, 16
  %v1546 = vpop.permute.xlu0 %1545
  %v1548 = vmul.f32 %v1184, %v1546
  %v1549 = vmul.f32 %v1185, %v1546
  %v1550 = vmul.f32 %v1186, %v1546
  %v1551 = vmul.f32 %v1187, %v1546
  %v1552 = vmul.f32 %v1188, %v1546
  %v1553 = vmul.f32 %v1189, %v1546
  %v1554 = vmul.f32 %v1190, %v1546
  %v1555 = vmul.f32 %v1191, %v1546
  %v1556 = vmul.f32 %v1192, %v1546
  %v1557 = vmul.f32 %v1193, %v1546
  %v1558 = vmul.f32 %v1194, %v1546
  %v1559 = vmul.f32 %v1195, %v1546
  %v1572 = vrot.slane %v1548, 1
  %v1573 = vrot.slane %v1550, 1
  %v1574 = vsel %vm100, %v1572, %v1573
  %v1575 = vrot.slane %v1549, 1
  %v1576 = vrot.slane %v1551, 1
  %v1577 = vsel %vm100, %v1575, %v1576
  %v1578 = vrot.slane %v1552, 1
  %v1579 = vsel %vm100, %v1573, %v1578
  %v1580 = vrot.slane %v1553, 1
  %v1581 = vsel %vm100, %v1576, %v1580
  %v1582 = vrot.slane %v1554, 1
  %v1583 = vrot.slane %v1556, 1
  %v1584 = vsel %vm100, %v1582, %v1583
  %v1585 = vrot.slane %v1555, 1
  %v1586 = vrot.slane %v1557, 1
  %v1587 = vsel %vm100, %v1585, %v1586
  %v1588 = vrot.slane %v1558, 1
  %v1589 = vsel %vm100, %v1583, %v1588
  %v1590 = vrot.slane %v1559, 1
  %v1591 = vsel %vm100, %v1586, %v1590
  %1592 = vrot.lane.b32.xlu0 %v1574, 112
  %v1593 = vpop.permute.xlu0 %1592
  %1594 = vrot.lane.b32.xlu0 %v1577, 112
  %v1595 = vpop.permute.xlu0 %1594
  %1596 = vrot.lane.b32.xlu0 %v1579, 112
  %v1597 = vpop.permute.xlu0 %1596
  %1598 = vrot.lane.b32.xlu0 %v1581, 112
  %v1599 = vpop.permute.xlu0 %1598
  %1600 = vrot.lane.b32.xlu0 %v1584, 112
  %v1601 = vpop.permute.xlu0 %1600
  %1602 = vrot.lane.b32.xlu0 %v1587, 112
  %v1603 = vpop.permute.xlu0 %1602
  %1604 = vrot.lane.b32.xlu0 %v1589, 112
  %v1605 = vpop.permute.xlu0 %1604
  %1606 = vrot.lane.b32.xlu0 %v1591, 112
  %v1607 = vpop.permute.xlu0 %1606
  %v1608 = vsel %vm407, %v1593, %v1595
  %v1609 = vsel %vm407, %v1597, %v1599
  %v1610 = vsel %vm407, %v1601, %v1603
  %v1611 = vsel %vm407, %v1605, %v1607
  %v1616 = vadd.f32 %v1536, %v1608
  %v1617 = vadd.f32 %v1537, %v1609
  %v1618 = vadd.f32 %v1538, %v1610
  %v1619 = vadd.f32 %v1539, %v1611
  %v1620 = vlaneseq
  %v1621 = vshrl.u32 %v1620, 7
  %v1622 = vsub.s32 0, %v1621
  %v1623 = vrot.slane %v47, %v1622
  %1625 = vrot.lane.b32.xlu0 %v1623, 16
  %v1626 = vpop.permute.xlu0 %1625
  %v1628 = vmul.f32 %v1184, %v1626
  %v1629 = vmul.f32 %v1185, %v1626
  %v1630 = vmul.f32 %v1186, %v1626
  %v1631 = vmul.f32 %v1187, %v1626
  %v1632 = vmul.f32 %v1188, %v1626
  %v1633 = vmul.f32 %v1189, %v1626
  %v1634 = vmul.f32 %v1190, %v1626
  %v1635 = vmul.f32 %v1191, %v1626
  %v1636 = vmul.f32 %v1192, %v1626
  %v1637 = vmul.f32 %v1193, %v1626
  %v1638 = vmul.f32 %v1194, %v1626
  %v1639 = vmul.f32 %v1195, %v1626
  %v1652 = vrot.slane %v1628, 2
  %v1653 = vrot.slane %v1630, 2
  %v1654 = vsel %vm135, %v1652, %v1653
  %v1655 = vrot.slane %v1629, 2
  %v1656 = vrot.slane %v1631, 2
  %v1657 = vsel %vm135, %v1655, %v1656
  %v1658 = vrot.slane %v1632, 2
  %v1659 = vsel %vm135, %v1653, %v1658
  %v1660 = vrot.slane %v1633, 2
  %v1661 = vsel %vm135, %v1656, %v1660
  %v1662 = vrot.slane %v1634, 2
  %v1663 = vrot.slane %v1636, 2
  %v1664 = vsel %vm135, %v1662, %v1663
  %v1665 = vrot.slane %v1635, 2
  %v1666 = vrot.slane %v1637, 2
  %v1667 = vsel %vm135, %v1665, %v1666
  %v1668 = vrot.slane %v1638, 2
  %v1669 = vsel %vm135, %v1663, %v1668
  %v1670 = vrot.slane %v1639, 2
  %v1671 = vsel %vm135, %v1666, %v1670
  %1672 = vrot.lane.b32.xlu0 %v1654, 112
  %v1673 = vpop.permute.xlu0 %1672
  %1674 = vrot.lane.b32.xlu0 %v1657, 112
  %v1675 = vpop.permute.xlu0 %1674
  %1676 = vrot.lane.b32.xlu0 %v1659, 112
  %v1677 = vpop.permute.xlu0 %1676
  %1678 = vrot.lane.b32.xlu0 %v1661, 112
  %v1679 = vpop.permute.xlu0 %1678
  %1680 = vrot.lane.b32.xlu0 %v1664, 112
  %v1681 = vpop.permute.xlu0 %1680
  %1682 = vrot.lane.b32.xlu0 %v1667, 112
  %v1683 = vpop.permute.xlu0 %1682
  %1684 = vrot.lane.b32.xlu0 %v1669, 112
  %v1685 = vpop.permute.xlu0 %1684
  %1686 = vrot.lane.b32.xlu0 %v1671, 112
  %v1687 = vpop.permute.xlu0 %1686
  %v1688 = vsel %vm407, %v1673, %v1675
  %v1689 = vsel %vm407, %v1677, %v1679
  %v1690 = vsel %vm407, %v1681, %v1683
  %v1691 = vsel %vm407, %v1685, %v1687
  %v1696 = vadd.f32 %v1616, %v1688
  %v1697 = vadd.f32 %v1617, %v1689
  %v1698 = vadd.f32 %v1618, %v1690
  %v1699 = vadd.f32 %v1619, %v1691
  %v1700 = vld [vmem:[%s8] sm:$0xff]
  %v1701 = vld [vmem:[%s8 + $0x8] sm:$0xff]
  %v1702 = vld [vmem:[%s8 + $0x10] sm:$0xff]
  %v1703 = vld [vmem:[%s8 + $0x18] sm:$0xff]
  %v1704 = vld [vmem:[%s8 + $0x20] sm:$0xff]
  %v1705 = vld [vmem:[%s8 + $0x28] sm:$0xff]
  %v1706 = vld [vmem:[%s8 + $0x30] sm:$0xff]
  %v1707 = vld [vmem:[%s8 + $0x38] sm:$0xff]
  %v1708 = vld [vmem:[%s8 + $0x40] sm:$0xff]
  %v1709 = vld [vmem:[%s8 + $0x48] sm:$0xff]
  %v1710 = vld [vmem:[%s8 + $0x50] sm:$0xff]
  %v1711 = vld [vmem:[%s8 + $0x58] sm:$0xff]
  %v1712 = vld [vmem:[%s8 + $0x60] sm:$0xff]
  %v1713 = vld [vmem:[%s8 + $0x68] sm:$0xff]
  %v1714 = vld [vmem:[%s8 + $0x70] sm:$0xff]
  %v1715 = vld [vmem:[%s8 + $0x78] sm:$0xff]
  %v1716 = vld [vmem:[%s8 + $0x80] sm:$0xff]
  %v1717 = vld [vmem:[%s8 + $0x88] sm:$0xff]
  %v1718 = vld [vmem:[%s8 + $0x90] sm:$0xff]
  %v1719 = vld [vmem:[%s8 + $0x98] sm:$0xff]
  %v1720 = vld [vmem:[%s8 + $0xa0] sm:$0xff]
  %v1721 = vld [vmem:[%s8 + $0xa8] sm:$0xff]
  %v1722 = vld [vmem:[%s8 + $0xb0] sm:$0xff]
  %v1723 = vld [vmem:[%s8 + $0xb8] sm:$0xff]
  %v1724 = vld [vmem:[%s8 + $0xc0] sm:$0xff]
  %v1725 = vld [vmem:[%s8 + $0xc8] sm:$0xff]
  %v1726 = vld [vmem:[%s8 + $0xd0] sm:$0xff]
  %v1727 = vld [vmem:[%s8 + $0xd8] sm:$0xff]
  %v1728 = vld [vmem:[%s8 + $0xe0] sm:$0xff]
  %v1729 = vld [vmem:[%s8 + $0xe8] sm:$0xff]
  %v1730 = vld [vmem:[%s8 + $0xf0] sm:$0xff]
  %v1731 = vld [vmem:[%s8 + $0xf8] sm:$0xff]
  %1732 = vmatprep.subr.mxu0 %v1701
  %1733 = vmatpush1.msra.mxu0 %v1700
  %1734 = vmatprep.subr.mxu0 %v1703
  %1735 = vmatpush1.msra.mxu0 %v1702
  %1736 = vmatprep.subr.mxu0 %v1705
  %1737 = vmatpush1.msra.mxu0 %v1704
  %1738 = vmatprep.subr.mxu0 %v1707
  %1739 = vmatpush1.msra.mxu0 %v1706
  %1740 = vmatprep.subr.mxu0 %v1709
  %1741 = vmatpush1.msra.mxu0 %v1708
  %1742 = vmatprep.subr.mxu0 %v1711
  %1743 = vmatpush1.msra.mxu0 %v1710
  %1744 = vmatprep.subr.mxu0 %v1713
  %1745 = vmatpush1.msra.mxu0 %v1712
  %1746 = vmatprep.subr.mxu0 %v1715
  %1747 = vmatpush1.msra.mxu0 %v1714
  %1748 = vmatprep.subr.mxu0 %v1717
  %1749 = vmatpush1.msra.mxu0 %v1716
  %1750 = vmatprep.subr.mxu0 %v1719
  %1751 = vmatpush1.msra.mxu0 %v1718
  %1752 = vmatprep.subr.mxu0 %v1721
  %1753 = vmatpush1.msra.mxu0 %v1720
  %1754 = vmatprep.subr.mxu0 %v1723
  %1755 = vmatpush1.msra.mxu0 %v1722
  %1756 = vmatprep.subr.mxu0 %v1725
  %1757 = vmatpush1.msra.mxu0 %v1724
  %1758 = vmatprep.subr.mxu0 %v1727
  %1759 = vmatpush1.msra.mxu0 %v1726
  %1760 = vmatprep.subr.mxu0 %v1729
  %1761 = vmatpush1.msra.mxu0 %v1728
  %1762 = vmatprep.subr.mxu0 %v1731
  %1763 = vmatpush1.msra.mxu0 %v1730
  %1764 = vmatprep.subr.mxu0 0.0
  %1765 = vmatpush1.msra.mxu0 0.0
  %1766 = vmatprep.subr.mxu0 0.0
  %1767 = vmatpush1.msra.mxu0 0.0
  %1768 = vmatprep.subr.mxu0 0.0
  %1769 = vmatpush1.msra.mxu0 0.0
  %1770 = vmatprep.subr.mxu0 0.0
  %1771 = vmatpush1.msra.mxu0 0.0
  %1772 = vmatprep.subr.mxu0 0.0
  %1773 = vmatpush1.msra.mxu0 0.0
  %1774 = vmatprep.subr.mxu0 0.0
  %1775 = vmatpush1.msra.mxu0 0.0
  %1776 = vmatprep.subr.mxu0 0.0
  %1777 = vmatpush1.msra.mxu0 0.0
  %1778 = vmatprep.subr.mxu0 0.0
  %1779 = vmatpush1.msra.mxu0 0.0
  %1780 = vmatprep.subr.mxu0 0.0
  %1781 = vmatpush1.msra.mxu0 0.0
  %1782 = vmatprep.subr.mxu0 0.0
  %1783 = vmatpush1.msra.mxu0 0.0
  %1784 = vmatprep.subr.mxu0 0.0
  %1785 = vmatpush1.msra.mxu0 0.0
  %1786 = vmatprep.subr.mxu0 0.0
  %1787 = vmatpush1.msra.mxu0 0.0
  %1788 = vmatprep.subr.mxu0 0.0
  %1789 = vmatpush1.msra.mxu0 0.0
  %1790 = vmatprep.subr.mxu0 0.0
  %1791 = vmatpush1.msra.mxu0 0.0
  %1792 = vmatprep.subr.mxu0 0.0
  %1793 = vmatpush1.msra.mxu0 0.0
  %1794 = vmatprep.subr.mxu0 0.0
  %1795 = vmatpush1.msra.mxu0 0.0
  %1796 = vmatprep.mubr.f32.mxu0 0.0
  %1797 = vmatmul.mubr.f32.gmra.mrb[0].mxu0 %v1696
  %v1798 = vpop.f32.mrb[0].mxu0
  %v1799 = vadd.f32 0.0, %v1798
  %v1800 = vpop.f32.mrb[0].mxu0
  %v1801 = vadd.f32 0.0, %v1800
  %1802 = vmatprep.mubr.f32.mxu0 0.0
  %1803 = vmatmul.mubr.f32.gmra.mrb[0].mxu0 %v1697
  %v1804 = vpop.f32.mrb[0].mxu0
  %v1805 = vadd.f32 0.0, %v1804
  %v1806 = vpop.f32.mrb[0].mxu0
  %v1807 = vadd.f32 0.0, %v1806
  %1808 = vmatprep.mubr.f32.mxu0 0.0
  %1809 = vmatmul.mubr.f32.gmra.mrb[0].mxu0 %v1698
  %v1810 = vpop.f32.mrb[0].mxu0
  %v1811 = vadd.f32 0.0, %v1810
  %v1812 = vpop.f32.mrb[0].mxu0
  %v1813 = vadd.f32 0.0, %v1812
  %1814 = vmatprep.mubr.f32.mxu0 0.0
  %1815 = vmatmul.mubr.f32.gmra.mrb[0].mxu0 %v1699
  %v1816 = vpop.f32.mrb[0].mxu0
  %v1817 = vadd.f32 0.0, %v1816
  %v1818 = vpop.f32.mrb[0].mxu0
  %v1819 = vadd.f32 0.0, %v1818
  %1820 = vdwg.mxu0
  %v1821 = vadd.f32 %v1799, %v1805
  %v1822 = vadd.f32 %v1821, %v1811
  %v1823 = vadd.f32 %v1822, %v1817
  %v1824 = vrot.slane %v1823, 4
  %v1825 = vadd.f32 %v1823, %v1824
  %v1826 = vrot.slane %v1825, 2
  %v1827 = vadd.f32 %v1825, %v1826
  %v1828 = vrot.slane %v1827, 1
  %v1829 = vadd.f32 %v1827, %v1828
  %v1830 = vadd.f32 %v1801, %v1807
  %v1831 = vadd.f32 %v1830, %v1813
  %v1832 = vadd.f32 %v1831, %v1819
  %v1833 = vrot.slane %v1832, 4
  %v1834 = vadd.f32 %v1832, %v1833
  %v1835 = vrot.slane %v1834, 2
  %v1836 = vadd.f32 %v1834, %v1835
  %v1837 = vrot.slane %v1836, 1
  %v1838 = vadd.f32 %v1836, %v1837
  %v1839 = vmul.f32 %v1799, %v1799
  %v1840 = vmul.f32 %v1801, %v1801
  %v1841 = vmul.f32 %v1805, %v1805
  %v1842 = vmul.f32 %v1807, %v1807
  %v1843 = vmul.f32 %v1811, %v1811
  %v1844 = vmul.f32 %v1813, %v1813
  %v1845 = vmul.f32 %v1817, %v1817
  %v1846 = vmul.f32 %v1819, %v1819
  %v1847 = vadd.f32 %v1839, %v1841
  %v1848 = vadd.f32 %v1847, %v1843
  %v1849 = vadd.f32 %v1848, %v1845
  %v1850 = vrot.slane %v1849, 4
  %v1851 = vadd.f32 %v1849, %v1850
  %v1852 = vrot.slane %v1851, 2
  %v1853 = vadd.f32 %v1851, %v1852
  %v1854 = vrot.slane %v1853, 1
  %v1855 = vadd.f32 %v1853, %v1854
  %v1856 = vadd.f32 %v1840, %v1842
  %v1857 = vadd.f32 %v1856, %v1844
  %v1858 = vadd.f32 %v1857, %v1846
  %v1859 = vrot.slane %v1858, 4
  %v1860 = vadd.f32 %v1858, %v1859
  %v1861 = vrot.slane %v1860, 2
  %v1862 = vadd.f32 %v1860, %v1861
  %v1863 = vrot.slane %v1862, 1
  %v1864 = vadd.f32 %v1862, %v1863
  %1865 = vst [vmem:[%s13] sm:$0xff] %v1799
  %1866 = vst [vmem:[%s13 + $0x8] sm:$0xff] %v1801
  %1867 = vst [vmem:[%s13 + $0x10] sm:$0xff] %v1805
  %1868 = vst [vmem:[%s13 + $0x18] sm:$0xff] %v1807
  %1869 = vst [vmem:[%s13 + $0x20] sm:$0xff] %v1811
  %1870 = vst [vmem:[%s13 + $0x28] sm:$0xff] %v1813
  %1871 = vst [vmem:[%s13 + $0x30] sm:$0xff] %v1817
  %1872 = vst [vmem:[%s13 + $0x38] sm:$0xff] %v1819
  %v1873 = vld [vmem:[%s9] sm:$0xff]
  %v1874 = vld [vmem:[%s9 + $0x8] sm:$0xff]
  %v1875 = vld [vmem:[%s9 + $0x10] sm:$0xff]
  %v1876 = vld [vmem:[%s9 + $0x18] sm:$0xff]
  %v1877 = vld [vmem:[%s9 + $0x20] sm:$0xff]
  %v1878 = vld [vmem:[%s9 + $0x28] sm:$0xff]
  %v1879 = vld [vmem:[%s9 + $0x30] sm:$0xff]
  %v1880 = vld [vmem:[%s9 + $0x38] sm:$0xff]
  %v1881 = vld [vmem:[%s9 + $0x40] sm:$0xff]
  %v1882 = vld [vmem:[%s9 + $0x48] sm:$0xff]
  %v1883 = vld [vmem:[%s9 + $0x50] sm:$0xff]
  %v1884 = vld [vmem:[%s9 + $0x58] sm:$0xff]
  %v1885 = vld [vmem:[%s9 + $0x60] sm:$0xff]
  %v1886 = vld [vmem:[%s9 + $0x68] sm:$0xff]
  %v1887 = vld [vmem:[%s9 + $0x70] sm:$0xff]
  %v1888 = vld [vmem:[%s9 + $0x78] sm:$0xff]
  %v1889 = vld [vmem:[%s9 + $0x80] sm:$0xff]
  %v1890 = vld [vmem:[%s9 + $0x88] sm:$0xff]
  %v1891 = vld [vmem:[%s9 + $0x90] sm:$0xff]
  %v1892 = vld [vmem:[%s9 + $0x98] sm:$0xff]
  %v1893 = vld [vmem:[%s9 + $0xa0] sm:$0xff]
  %v1894 = vld [vmem:[%s9 + $0xa8] sm:$0xff]
  %v1895 = vld [vmem:[%s9 + $0xb0] sm:$0xff]
  %v1896 = vld [vmem:[%s9 + $0xb8] sm:$0xff]
  %v1897 = vld [vmem:[%s9 + $0xc0] sm:$0xff]
  %v1898 = vld [vmem:[%s9 + $0xc8] sm:$0xff]
  %v1899 = vld [vmem:[%s9 + $0xd0] sm:$0xff]
  %v1900 = vld [vmem:[%s9 + $0xd8] sm:$0xff]
  %v1901 = vld [vmem:[%s9 + $0xe0] sm:$0xff]
  %v1902 = vld [vmem:[%s9 + $0xe8] sm:$0xff]
  %v1903 = vld [vmem:[%s9 + $0xf0] sm:$0xff]
  %v1904 = vld [vmem:[%s9 + $0xf8] sm:$0xff]
  %1905 = vmatprep.subr.mxu0 0.0
  %1906 = vmatpush1.msra.mxu0 %v1873
  %1907 = vmatprep.subr.mxu0 0.0
  %1908 = vmatpush1.msra.mxu0 %v1874
  %1909 = vmatprep.subr.mxu0 0.0
  %1910 = vmatpush1.msra.mxu0 %v1875
  %1911 = vmatprep.subr.mxu0 0.0
  %1912 = vmatpush1.msra.mxu0 %v1876
  %1913 = vmatprep.subr.mxu0 0.0
  %1914 = vmatpush1.msra.mxu0 %v1877
  %1915 = vmatprep.subr.mxu0 0.0
  %1916 = vmatpush1.msra.mxu0 %v1878
  %1917 = vmatprep.subr.mxu0 0.0
  %1918 = vmatpush1.msra.mxu0 %v1879
  %1919 = vmatprep.subr.mxu0 0.0
  %1920 = vmatpush1.msra.mxu0 %v1880
  %1921 = vmatprep.subr.mxu0 0.0
  %1922 = vmatpush1.msra.mxu0 %v1881
  %1923 = vmatprep.subr.mxu0 0.0
  %1924 = vmatpush1.msra.mxu0 %v1882
  %1925 = vmatprep.subr.mxu0 0.0
  %1926 = vmatpush1.msra.mxu0 %v1883
  %1927 = vmatprep.subr.mxu0 0.0
  %1928 = vmatpush1.msra.mxu0 %v1884
  %1929 = vmatprep.subr.mxu0 0.0
  %1930 = vmatpush1.msra.mxu0 %v1885
  %1931 = vmatprep.subr.mxu0 0.0
  %1932 = vmatpush1.msra.mxu0 %v1886
  %1933 = vmatprep.subr.mxu0 0.0
  %1934 = vmatpush1.msra.mxu0 %v1887
  %1935 = vmatprep.subr.mxu0 0.0
  %1936 = vmatpush1.msra.mxu0 %v1888
  %1937 = vmatprep.subr.mxu0 0.0
  %1938 = vmatpush1.msra.mxu0 %v1889
  %1939 = vmatprep.subr.mxu0 0.0
  %1940 = vmatpush1.msra.mxu0 %v1890
  %1941 = vmatprep.subr.mxu0 0.0
  %1942 = vmatpush1.msra.mxu0 %v1891
  %1943 = vmatprep.subr.mxu0 0.0
  %1944 = vmatpush1.msra.mxu0 %v1892
  %1945 = vmatprep.subr.mxu0 0.0
  %1946 = vmatpush1.msra.mxu0 %v1893
  %1947 = vmatprep.subr.mxu0 0.0
  %1948 = vmatpush1.msra.mxu0 %v1894
  %1949 = vmatprep.subr.mxu0 0.0
  %1950 = vmatpush1.msra.mxu0 %v1895
  %1951 = vmatprep.subr.mxu0 0.0
  %1952 = vmatpush1.msra.mxu0 %v1896
  %1953 = vmatprep.subr.mxu0 0.0
  %1954 = vmatpush1.msra.mxu0 %v1897
  %1955 = vmatprep.subr.mxu0 0.0
  %1956 = vmatpush1.msra.mxu0 %v1898
  %1957 = vmatprep.subr.mxu0 0.0
  %1958 = vmatpush1.msra.mxu0 %v1899
  %1959 = vmatprep.subr.mxu0 0.0
  %1960 = vmatpush1.msra.mxu0 %v1900
  %1961 = vmatprep.subr.mxu0 0.0
  %1962 = vmatpush1.msra.mxu0 %v1901
  %1963 = vmatprep.subr.mxu0 0.0
  %1964 = vmatpush1.msra.mxu0 %v1902
  %1965 = vmatprep.subr.mxu0 0.0
  %1966 = vmatpush1.msra.mxu0 %v1903
  %1967 = vmatprep.subr.mxu0 0.0
  %1968 = vmatpush1.msra.mxu0 %v1904
  %1969 = vmatprep.mubr.f32.mxu0 %v1838
  %1970 = vmatmul.mubr.f32.gmra.mrb[0].mxu0 %v1829
  %v1971 = vpop.f32.mrb[0].mxu0
  %v1972 = vadd.f32 0.0, %v1971
  %v1973 = vpop.f32.mrb[0].mxu0
  %1974 = vdwg.mxu0
  %1975 = vmatprep.subr.mxu0 0.0
  %1976 = vmatpush1.msra.mxu0 %v1873
  %1977 = vmatprep.subr.mxu0 0.0
  %1978 = vmatpush1.msra.mxu0 %v1874
  %1979 = vmatprep.subr.mxu0 0.0
  %1980 = vmatpush1.msra.mxu0 %v1875
  %1981 = vmatprep.subr.mxu0 0.0
  %1982 = vmatpush1.msra.mxu0 %v1876
  %1983 = vmatprep.subr.mxu0 0.0
  %1984 = vmatpush1.msra.mxu0 %v1877
  %1985 = vmatprep.subr.mxu0 0.0
  %1986 = vmatpush1.msra.mxu0 %v1878
  %1987 = vmatprep.subr.mxu0 0.0
  %1988 = vmatpush1.msra.mxu0 %v1879
  %1989 = vmatprep.subr.mxu0 0.0
  %1990 = vmatpush1.msra.mxu0 %v1880
  %1991 = vmatprep.subr.mxu0 0.0
  %1992 = vmatpush1.msra.mxu0 %v1881
  %1993 = vmatprep.subr.mxu0 0.0
  %1994 = vmatpush1.msra.mxu0 %v1882
  %1995 = vmatprep.subr.mxu0 0.0
  %1996 = vmatpush1.msra.mxu0 %v1883
  %1997 = vmatprep.subr.mxu0 0.0
  %1998 = vmatpush1.msra.mxu0 %v1884
  %1999 = vmatprep.subr.mxu0 0.0
  %2000 = vmatpush1.msra.mxu0 %v1885
  %2001 = vmatprep.subr.mxu0 0.0
  %2002 = vmatpush1.msra.mxu0 %v1886
  %2003 = vmatprep.subr.mxu0 0.0
  %2004 = vmatpush1.msra.mxu0 %v1887
  %2005 = vmatprep.subr.mxu0 0.0
  %2006 = vmatpush1.msra.mxu0 %v1888
  %2007 = vmatprep.subr.mxu0 0.0
  %2008 = vmatpush1.msra.mxu0 %v1889
  %2009 = vmatprep.subr.mxu0 0.0
  %2010 = vmatpush1.msra.mxu0 %v1890
  %2011 = vmatprep.subr.mxu0 0.0
  %2012 = vmatpush1.msra.mxu0 %v1891
  %2013 = vmatprep.subr.mxu0 0.0
  %2014 = vmatpush1.msra.mxu0 %v1892
  %2015 = vmatprep.subr.mxu0 0.0
  %2016 = vmatpush1.msra.mxu0 %v1893
  %2017 = vmatprep.subr.mxu0 0.0
  %2018 = vmatpush1.msra.mxu0 %v1894
  %2019 = vmatprep.subr.mxu0 0.0
  %2020 = vmatpush1.msra.mxu0 %v1895
  %2021 = vmatprep.subr.mxu0 0.0
  %2022 = vmatpush1.msra.mxu0 %v1896
  %2023 = vmatprep.subr.mxu0 0.0
  %2024 = vmatpush1.msra.mxu0 %v1897
  %2025 = vmatprep.subr.mxu0 0.0
  %2026 = vmatpush1.msra.mxu0 %v1898
  %2027 = vmatprep.subr.mxu0 0.0
  %2028 = vmatpush1.msra.mxu0 %v1899
  %2029 = vmatprep.subr.mxu0 0.0
  %2030 = vmatpush1.msra.mxu0 %v1900
  %2031 = vmatprep.subr.mxu0 0.0
  %2032 = vmatpush1.msra.mxu0 %v1901
  %2033 = vmatprep.subr.mxu0 0.0
  %2034 = vmatpush1.msra.mxu0 %v1902
  %2035 = vmatprep.subr.mxu0 0.0
  %2036 = vmatpush1.msra.mxu0 %v1903
  %2037 = vmatprep.subr.mxu0 0.0
  %2038 = vmatpush1.msra.mxu0 %v1904
  %2039 = vmatprep.mubr.f32.mxu0 %v1864
  %2040 = vmatmul.mubr.f32.gmra.mrb[0].mxu0 %v1855
  %v2041 = vpop.f32.mrb[0].mxu0
  %v2042 = vadd.f32 0.0, %v2041
  %v2043 = vpop.f32.mrb[0].mxu0
  %2044 = vdwg.mxu0
  %v2045 = vmul.f32 %v1972, %v918
  %v2046 = vmul.f32 %v2042, %v918
  %v2047 = vmul.f32 %v2045, %v2045
  %v2048 = vsub.f32 %v2046, %v2047
  %v2049 = vmax.f32 %v2048, 0.0
  %v2050 = vld [vmem:[%s11] sm:$0x1]
  %v2051 = vadd.f32 %v2049, 1e-05
  %v2052 = vrsqrt.pop %v2051
  %v2053 = vmul.f32 %v2050, %v2052
  %v2054 = vld [vmem:[%s12] sm:$0x1]
  %v2055 = vmul.f32 %v2045, %v2053
  %v2056 = vsub.f32 %v2054, %v2055
  %v2057 = vld [vmem:[%s10] sm:$0xff]
  %v2058 = vld [vmem:[%s10 + $0x8] sm:$0xff]
  %v2059 = vld [vmem:[%s10 + $0x10] sm:$0xff]
  %v2060 = vld [vmem:[%s10 + $0x18] sm:$0xff]
  %v2062 = vsel %vm710, %v2053, 0
  %2064 = vmatprep.subr.mxu0 %v2058
  %2065 = vmatpush1.msra.mxu0 %v2057
  %2066 = vmatprep.subr.mxu0 %v2060
  %2067 = vmatpush1.msra.mxu0 %v2059
  %2068 = vmatprep.subr.mxu0 0.0
  %2069 = vmatpush1.msra.mxu0 0.0
  %2070 = vmatprep.subr.mxu0 0.0
  %2071 = vmatpush1.msra.mxu0 0.0
  %2072 = vmatprep.subr.mxu0 0.0
  %2073 = vmatpush1.msra.mxu0 0.0
  %2074 = vmatprep.subr.mxu0 0.0
  %2075 = vmatpush1.msra.mxu0 0.0
  %2076 = vmatprep.subr.mxu0 0.0
  %2077 = vmatpush1.msra.mxu0 0.0
  %2078 = vmatprep.subr.mxu0 0.0
  %2079 = vmatpush1.msra.mxu0 0.0
  %2080 = vmatprep.subr.mxu0 0.0
  %2081 = vmatpush1.msra.mxu0 0.0
  %2082 = vmatprep.subr.mxu0 0.0
  %2083 = vmatpush1.msra.mxu0 0.0
  %2084 = vmatprep.subr.mxu0 0.0
  %2085 = vmatpush1.msra.mxu0 0.0
  %2086 = vmatprep.subr.mxu0 0.0
  %2087 = vmatpush1.msra.mxu0 0.0
  %2088 = vmatprep.subr.mxu0 0.0
  %2089 = vmatpush1.msra.mxu0 0.0
  %2090 = vmatprep.subr.mxu0 0.0
  %2091 = vmatpush1.msra.mxu0 0.0
  %2092 = vmatprep.subr.mxu0 0.0
  %2093 = vmatpush1.msra.mxu0 0.0
  %2094 = vmatprep.subr.mxu0 0.0
  %2095 = vmatpush1.msra.mxu0 0.0
  %2096 = vmatprep.subr.mxu0 0.0
  %2097 = vmatpush1.msra.mxu0 0.0
  %2098 = vmatprep.subr.mxu0 0.0
  %2099 = vmatpush1.msra.mxu0 0.0
  %2100 = vmatprep.subr.mxu0 0.0
  %2101 = vmatpush1.msra.mxu0 0.0
  %2102 = vmatprep.subr.mxu0 0.0
  %2103 = vmatpush1.msra.mxu0 0.0
  %2104 = vmatprep.subr.mxu0 0.0
  %2105 = vmatpush1.msra.mxu0 0.0
  %2106 = vmatprep.subr.mxu0 0.0
  %2107 = vmatpush1.msra.mxu0 0.0
  %2108 = vmatprep.subr.mxu0 0.0
  %2109 = vmatpush1.msra.mxu0 0.0
  %2110 = vmatprep.subr.mxu0 0.0
  %2111 = vmatpush1.msra.mxu0 0.0
  %2112 = vmatprep.subr.mxu0 0.0
  %2113 = vmatpush1.msra.mxu0 0.0
  %2114 = vmatprep.subr.mxu0 0.0
  %2115 = vmatpush1.msra.mxu0 0.0
  %2116 = vmatprep.subr.mxu0 0.0
  %2117 = vmatpush1.msra.mxu0 0.0
  %2118 = vmatprep.subr.mxu0 0.0
  %2119 = vmatpush1.msra.mxu0 0.0
  %2120 = vmatprep.subr.mxu0 0.0
  %2121 = vmatpush1.msra.mxu0 0.0
  %2122 = vmatprep.subr.mxu0 0.0
  %2123 = vmatpush1.msra.mxu0 0.0
  %2124 = vmatprep.subr.mxu0 0.0
  %2125 = vmatpush1.msra.mxu0 0.0
  %2126 = vmatprep.subr.mxu0 0.0
  %2127 = vmatpush1.msra.mxu0 0.0
  %2128 = vmatprep.mubr.f32.mxu0 0.0
  %2129 = vmatmul.mubr.f32.gmra.mrb[0].mxu0 %v2062
  %v2130 = vpop.f32.mrb[0].mxu0
  %v2131 = vadd.f32 0.0, %v2130
  %v2132 = vpop.f32.mrb[0].mxu0
  %v2133 = vadd.f32 0.0, %v2132
  %2134 = vdwg.mxu0
  %v2136 = vsel %vm710, %v2056, 0
  %2138 = vmatprep.subr.mxu0 %v2058
  %2139 = vmatpush1.msra.mxu0 %v2057
  %2140 = vmatprep.subr.mxu0 %v2060
  %2141 = vmatpush1.msra.mxu0 %v2059
  %2142 = vmatprep.subr.mxu0 0.0
  %2143 = vmatpush1.msra.mxu0 0.0
  %2144 = vmatprep.subr.mxu0 0.0
  %2145 = vmatpush1.msra.mxu0 0.0
  %2146 = vmatprep.subr.mxu0 0.0
  %2147 = vmatpush1.msra.mxu0 0.0
  %2148 = vmatprep.subr.mxu0 0.0
  %2149 = vmatpush1.msra.mxu0 0.0
  %2150 = vmatprep.subr.mxu0 0.0
  %2151 = vmatpush1.msra.mxu0 0.0
  %2152 = vmatprep.subr.mxu0 0.0
  %2153 = vmatpush1.msra.mxu0 0.0
  %2154 = vmatprep.subr.mxu0 0.0
  %2155 = vmatpush1.msra.mxu0 0.0
  %2156 = vmatprep.subr.mxu0 0.0
  %2157 = vmatpush1.msra.mxu0 0.0
  %2158 = vmatprep.subr.mxu0 0.0
  %2159 = vmatpush1.msra.mxu0 0.0
  %2160 = vmatprep.subr.mxu0 0.0
  %2161 = vmatpush1.msra.mxu0 0.0
  %2162 = vmatprep.subr.mxu0 0.0
  %2163 = vmatpush1.msra.mxu0 0.0
  %2164 = vmatprep.subr.mxu0 0.0
  %2165 = vmatpush1.msra.mxu0 0.0
  %2166 = vmatprep.subr.mxu0 0.0
  %2167 = vmatpush1.msra.mxu0 0.0
  %2168 = vmatprep.subr.mxu0 0.0
  %2169 = vmatpush1.msra.mxu0 0.0
  %2170 = vmatprep.subr.mxu0 0.0
  %2171 = vmatpush1.msra.mxu0 0.0
  %2172 = vmatprep.subr.mxu0 0.0
  %2173 = vmatpush1.msra.mxu0 0.0
  %2174 = vmatprep.subr.mxu0 0.0
  %2175 = vmatpush1.msra.mxu0 0.0
  %2176 = vmatprep.subr.mxu0 0.0
  %2177 = vmatpush1.msra.mxu0 0.0
  %2178 = vmatprep.subr.mxu0 0.0
  %2179 = vmatpush1.msra.mxu0 0.0
  %2180 = vmatprep.subr.mxu0 0.0
  %2181 = vmatpush1.msra.mxu0 0.0
  %2182 = vmatprep.subr.mxu0 0.0
  %2183 = vmatpush1.msra.mxu0 0.0
  %2184 = vmatprep.subr.mxu0 0.0
  %2185 = vmatpush1.msra.mxu0 0.0
  %2186 = vmatprep.subr.mxu0 0.0
  %2187 = vmatpush1.msra.mxu0 0.0
  %2188 = vmatprep.subr.mxu0 0.0
  %2189 = vmatpush1.msra.mxu0 0.0
  %2190 = vmatprep.subr.mxu0 0.0
  %2191 = vmatpush1.msra.mxu0 0.0
  %2192 = vmatprep.subr.mxu0 0.0
  %2193 = vmatpush1.msra.mxu0 0.0
  %2194 = vmatprep.subr.mxu0 0.0
  %2195 = vmatpush1.msra.mxu0 0.0
  %2196 = vmatprep.subr.mxu0 0.0
  %2197 = vmatpush1.msra.mxu0 0.0
  %2198 = vmatprep.subr.mxu0 0.0
  %2199 = vmatpush1.msra.mxu0 0.0
  %2200 = vmatprep.subr.mxu0 0.0
  %2201 = vmatpush1.msra.mxu0 0.0
  %2202 = vmatprep.mubr.f32.mxu0 0.0
  %2203 = vmatmul.mubr.f32.gmra.mrb[0].mxu0 %v2136
  %v2204 = vpop.f32.mrb[0].mxu0
  %v2205 = vadd.f32 0.0, %v2204
  %v2206 = vpop.f32.mrb[0].mxu0
  %v2207 = vadd.f32 0.0, %v2206
  %2208 = vdwg.mxu0
  %v2209 = vld [vmem:[%s13] sm:$0xff]
  %v2210 = vld [vmem:[%s13 + $0x8] sm:$0xff]
  %v2211 = vld [vmem:[%s13 + $0x10] sm:$0xff]
  %v2212 = vld [vmem:[%s13 + $0x18] sm:$0xff]
  %v2213 = vld [vmem:[%s13 + $0x20] sm:$0xff]
  %v2214 = vld [vmem:[%s13 + $0x28] sm:$0xff]
  %v2215 = vld [vmem:[%s13 + $0x30] sm:$0xff]
  %v2216 = vld [vmem:[%s13 + $0x38] sm:$0xff]
  %v2217 = vlaneseq
  %v2218 = vshrl.u32 %v2217, 7
  %v2219 = vsub.s32 0, %v2218
  %v2220 = vrot.slane %v2131, %v2219
  %v2221 = vlaneseq
  %v2222 = vshrl.u32 %v2221, 7
  %v2223 = vsub.s32 0, %v2222
  %v2224 = vrot.slane %v2133, %v2223
  %v2225 = vmul.f32 %v2209, %v2220
  %v2226 = vmul.f32 %v2210, %v2224
  %v2227 = vmul.f32 %v2211, %v2220
  %v2228 = vmul.f32 %v2212, %v2224
  %v2229 = vmul.f32 %v2213, %v2220
  %v2230 = vmul.f32 %v2214, %v2224
  %v2231 = vmul.f32 %v2215, %v2220
  %v2232 = vmul.f32 %v2216, %v2224
  %v2233 = vlaneseq
  %v2234 = vshrl.u32 %v2233, 7
  %v2235 = vsub.s32 0, %v2234
  %v2236 = vrot.slane %v2205, %v2235
  %v2237 = vlaneseq
  %v2238 = vshrl.u32 %v2237, 7
  %v2239 = vsub.s32 0, %v2238
  %v2240 = vrot.slane %v2207, %v2239
  %v2241 = vadd.f32 %v2225, %v2236
  %v2242 = vadd.f32 %v2226, %v2240
  %v2243 = vadd.f32 %v2227, %v2236
  %v2244 = vadd.f32 %v2228, %v2240
  %v2245 = vadd.f32 %v2229, %v2236
  %v2246 = vadd.f32 %v2230, %v2240
  %v2247 = vadd.f32 %v2231, %v2236
  %v2248 = vadd.f32 %v2232, %v2240
  %2249 = vst [vmem:[%s13] sm:$0xff] %v2241
  %2250 = vst [vmem:[%s13 + $0x8] sm:$0xff] %v2242
  %2251 = vst [vmem:[%s13 + $0x10] sm:$0xff] %v2243
  %2252 = vst [vmem:[%s13 + $0x18] sm:$0xff] %v2244
  %2253 = vst [vmem:[%s13 + $0x20] sm:$0xff] %v2245
  %2254 = vst [vmem:[%s13 + $0x28] sm:$0xff] %v2246
  %2255 = vst [vmem:[%s13 + $0x30] sm:$0xff] %v2247
  %2256 = vst [vmem:[%s13 + $0x38] sm:$0xff] %v2248
  // Predicated region
  $region54: #{sep_conv.1} parent=0 // pred_check
    _
  $region55: #{sep_conv.1} parent=0 // pred_check_branch
    %2258 = sbr.rel (0) target = $region57
  $region56: #{sep_conv.1} parent=0 // pred_region
    _
  $region57: #{sep_conv.1} parent=0 // pred_fallthru
    _
  // Predicated region
  $region58: #{sep_conv.1} parent=0 // pred_check
    _
  $region59: #{sep_conv.1} parent=0 // pred_check_branch
    %2260 = sbr.rel (0) target = $region61
  $region60: #{sep_conv.1} parent=0 // pred_region
    _
  $region61: #{sep_conv.1} parent=0 // pred_fallthru
    _

</llo_original>
